<compile_context>
chip_gen: v6e
topology: v6e:2x2x1
jax: 0.10.0
libtpu: 0.0.40
codegen_flags: <defaults>
</compile_context>

<pallas_src>
import functools

import jax
import jax.numpy as jnp
from jax.experimental import pallas as pl
from jax.experimental.pallas import tpu as pltpu


def _basic_layer_kernel(x_ref, scale_ref, shift_ref, w_ref, out_ref, pad_ref,
                        *, B, H, W, C, G):
    """Processes B batch images per grid step.

    x_ref:     (B, C, H*W)         input tile (NCHW with spatial flattened on lanes)
    scale_ref: (C, 1)              folded BN scale = gamma / sqrt(var + eps)
    shift_ref: (C, 1)              folded BN shift = beta - mean * scale
    w_ref:     (G, 9*C)            3x3 conv weights, column index = tap*C + c_in
    out_ref:   (B, C+G, H*W)       concat([x, conv_out], channel axis)
    pad_ref:   (C, H*W + 2*W + 2)  VMEM scratch: flat zero-padded activations
    """
    HW = H * W
    P = W + 1          # one-sided flat pad covering all dy in {-1,0,1} row shifts

    # Zero only the halo bands; the interior is fully overwritten every image.
    pad_ref[:, 0:P] = jnp.zeros((C, P), jnp.float32)
    pad_ref[:, P + HW:P + HW + P] = jnp.zeros((C, P), jnp.float32)

    scale = scale_ref[...]                      # (C, 1)
    shift = shift_ref[...]                      # (C, 1)
    w_all = w_ref[...]                          # (G, 9*C)

    # Column (w) index of every flattened spatial position; used to mask the
    # horizontal row-wrap introduced by the +-1 lane shifts.
    col = jax.lax.broadcasted_iota(jnp.int32, (1, HW), 1) % W
    left_ok = col >= 1                          # valid source exists for dx = -1
    right_ok = col <= W - 2                     # valid source exists for dx = +1

    for i in range(B):
        x = x_ref[i]                            # (C, HW)

        # BatchNorm (inference, folded) + ReLU, stored into the padded buffer.
        y = jnp.maximum(x * scale + shift, 0.0)
        pad_ref[:, P:P + HW] = y

        # 3x3 conv (padding=1): 9 lane-shifted windows of the padded
        # activations, contracted against per-tap (C -> G) weights with
        # VPU broadcast-FMAs.  Vertical out-of-range taps land in the zero
        # halo bands; horizontal row-wrap is masked with left_ok/right_ok.
        acc = jnp.zeros((G, HW), jnp.float32)
        for k in range(9):
            dy, dx = k // 3 - 1, k % 3 - 1
            start = (dy + 1) * W + (dx + 1)     # lane offset of this tap's window
            src = pad_ref[:, start:start + HW]  # (C, HW)
            if dx == -1:
                src = jnp.where(left_ok, src, 0.0)
            elif dx == 1:
                src = jnp.where(right_ok, src, 0.0)
            for c in range(C):
                w_col = w_all[:, k * C + c:k * C + c + 1]   # (G, 1)
                acc = acc + w_col * src[c:c + 1, :]         # (G, HW)

        # Channel concat: lane-dense stores (full H*W lanes per channel row).
        out_ref[i, 0:C, :] = x.astype(out_ref.dtype)
        out_ref[i, C:C + G, :] = acc.astype(out_ref.dtype)


def basic_layer_forward(x_nchw, gamma, beta, running_mean, running_var, conv_w,
                        eps=1e-5):
    """JAX/Pallas equivalent of BasicLayer.forward (eval mode, drop_rate=0)."""
    N, C, H, W = x_nchw.shape
    G = conv_w.shape[0]                                   # growth_rate
    HW = H * W

    # Stay in NCHW; just flatten the spatial dims (free reshape, no transpose).
    x = x_nchw.reshape(N, C, HW).astype(jnp.float32)

    # Fold BN running stats into a per-channel affine, laid out as (C, 1) so it
    # broadcasts along lanes inside the kernel.
    scale = gamma / jnp.sqrt(running_var + eps)
    shift = beta - running_mean * scale
    scale = scale.astype(jnp.float32).reshape(C, 1)
    shift = shift.astype(jnp.float32).reshape(C, 1)

    # Conv weight (G, C_in, 3, 3) -> (G, 9*C_in), column index = tap*C + c_in
    # with tap = ky*3 + kx.
    w_mat = jnp.transpose(conv_w, (0, 2, 3, 1)).reshape(G, 9 * C)
    w_mat = w_mat.astype(jnp.float32)

    # Batch-tile the grid, but keep >= 2 grid steps so both TensorCores on a
    # v7x chip get work (v5e/v6e have a single TC and are unaffected).
    if N >= 2:
        B = max(1, N // 2)
        while N % B:
            B -= 1
    else:
        B = 1

    kernel = functools.partial(_basic_layer_kernel, B=B, H=H, W=W, C=C, G=G)

    out = pl.pallas_call(
        kernel,
        out_shape=jax.ShapeDtypeStruct((N, C + G, HW), jnp.float32),
        grid_spec=pltpu.PrefetchScalarGridSpec(
            num_scalar_prefetch=0,
            grid=(N // B,),
            in_specs=[
                pl.BlockSpec((B, C, HW), lambda b: (b, 0, 0)),
                pl.BlockSpec((C, 1), lambda b: (0, 0)),
                pl.BlockSpec((C, 1), lambda b: (0, 0)),
                pl.BlockSpec((G, 9 * C), lambda b: (0, 0)),
            ],
            out_specs=pl.BlockSpec((B, C + G, HW), lambda b: (b, 0, 0)),
            scratch_shapes=[pltpu.VMEM((C, HW + 2 * W + 2), jnp.float32)],
        ),
        compiler_params=pltpu.CompilerParams(
            dimension_semantics=("parallel",)),
    )(x, scale, shift, w_mat)

    # (N, C+G, H*W) -> (N, C+G, H, W): contiguous reshape, no data movement.
    return out.reshape(N, C + G, H, W)


def basic_layer_reference(x_nchw, gamma, beta, running_mean, running_var,
                          conv_w, eps=1e-5):
    """Pure-JAX reference (for correctness checking)."""
    scale = gamma / jnp.sqrt(running_var + eps)
    shift = beta - running_mean * scale
    y = x_nchw * scale[None, :, None, None] + shift[None, :, None, None]
    y = jnp.maximum(y, 0.0)
    conv = jax.lax.conv_general_dilated(
        y, conv_w, window_strides=(1, 1), padding=((1, 1), (1, 1)),
        dimension_numbers=("NCHW", "OIHW", "NCHW"))
    return jnp.concatenate([x_nchw, conv], axis=1)


if __name__ == "__main__":
    # Small shapes consistent with the module: batch=2, num_channels=4,
    # spatial=16x16, growth_rate=8, drop_rate=0.0.
    N, C, H, W, G = 2, 4, 16, 16, 8

    key = jax.random.PRNGKey(0)
    kx, kg, kb, km, kv, kw = jax.random.split(key, 6)

    x = jax.random.normal(kx, (N, C, H, W), dtype=jnp.float32)

    # Deterministic synthetic parameters (eval-mode BN stats + conv weight).
    gamma = 1.0 + 0.1 * jax.random.normal(kg, (C,), dtype=jnp.float32)
    beta = 0.1 * jax.random.normal(kb, (C,), dtype=jnp.float32)
    running_mean = 0.1 * jax.random.normal(km, (C,), dtype=jnp.float32)
    running_var = jnp.abs(1.0 + 0.1 * jax.random.normal(kv, (C,), dtype=jnp.float32))
    conv_w = 0.1 * jax.random.normal(kw, (G, C, 3, 3), dtype=jnp.float32)

    out = basic_layer_forward(x, gamma, beta, running_mean, running_var, conv_w)
    out = jax.block_until_ready(out)

    ref = basic_layer_reference(x, gamma, beta, running_mean, running_var, conv_w)
    ref = jax.block_until_ready(ref)

    assert out.shape == (N, C + G, H, W), out.shape
    assert jnp.allclose(out, ref, atol=1e-4, rtol=1e-4), (
        float(jnp.max(jnp.abs(out - ref))))

    print("KERNEL_OK")
</pallas_src>

<mosaic_0001>
module attributes {stable_mosaic.version = 11 : i64} {
  func.func @_basic_layer_kernel(%arg0: i32, %arg1: memref<1x4x256xf32, #tpu.memory_space<vmem>>, %arg2: memref<4x1xf32, #tpu.memory_space<vmem>>, %arg3: memref<4x1xf32, #tpu.memory_space<vmem>>, %arg4: memref<8x36xf32, #tpu.memory_space<vmem>>, %arg5: memref<1x12x256xf32, #tpu.memory_space<vmem>>, %arg6: memref<4x290xf32, #tpu.memory_space<vmem>>) attributes {dimension_semantics = [#tpu.dimension_semantics<parallel>], iteration_bounds = array<i64: 2>, scalar_prefetch = 0 : i64, scratch_operands = 1 : i64, tpu.core_type = #tpu.core_type<tc>, window_params = [{transform_indices = @transform_0, window_bounds = array<i64: 1, 4, 256>}, {pipeline_mode = #tpu.pipeline_mode<synchronous>, transform_indices = @transform_1, window_bounds = array<i64: 4, 1>}, {pipeline_mode = #tpu.pipeline_mode<synchronous>, transform_indices = @transform_2, window_bounds = array<i64: 4, 1>}, {pipeline_mode = #tpu.pipeline_mode<synchronous>, transform_indices = @transform_3, window_bounds = array<i64: 8, 36>}, {transform_indices = @transform_4, window_bounds = array<i64: 1, 12, 256>}]} {
    %cst = arith.constant 0.000000e+00 : f32
    %0 = vector.broadcast %cst : f32 to vector<4x17xf32>
    %c0 = arith.constant 0 : index
    %c0_0 = arith.constant 0 : index
    %1 = vector.load %arg6[%c0, %c0_0] : memref<4x290xf32, #tpu.memory_space<vmem>>, vector<4x17xf32>
    tpu.vector_store %arg6[%c0, %c0_0], %0 {strides = array<i32>} : memref<4x290xf32, #tpu.memory_space<vmem>>, vector<4x17xf32>,
    %cst_1 = arith.constant 0.000000e+00 : f32
    %2 = vector.broadcast %cst_1 : f32 to vector<4x17xf32>
    %c0_2 = arith.constant 0 : index
    %c273 = arith.constant 273 : index
    %3 = vector.load %arg6[%c0_2, %c273] : memref<4x290xf32, #tpu.memory_space<vmem>>, vector<4x17xf32>
    tpu.vector_store %arg6[%c0_2, %c273], %2 {strides = array<i32>} : memref<4x290xf32, #tpu.memory_space<vmem>>, vector<4x17xf32>,
    %c0_3 = arith.constant 0 : index
    %c0_4 = arith.constant 0 : index
    %4 = vector.load %arg2[%c0_3, %c0_4] : memref<4x1xf32, #tpu.memory_space<vmem>>, vector<4x1xf32>
    %c0_5 = arith.constant 0 : index
    %c0_6 = arith.constant 0 : index
    %5 = vector.load %arg3[%c0_5, %c0_6] : memref<4x1xf32, #tpu.memory_space<vmem>>, vector<4x1xf32>
    %c0_7 = arith.constant 0 : index
    %c0_8 = arith.constant 0 : index
    %6 = vector.load %arg4[%c0_7, %c0_8] : memref<8x36xf32, #tpu.memory_space<vmem>>, vector<8x36xf32>
    %7 = tpu.iota {dimensions = array<i32: 1>} : vector<1x256xi32>
    %c16_i32 = arith.constant 16 : i32
    %c0_i32 = arith.constant 0 : i32
    %8 = arith.cmpi eq, %c16_i32, %c0_i32 : i32
    %c1_i32 = arith.constant 1 : i32
    %9 = arith.select %8, %c1_i32, %c16_i32 : i32
    %10 = vector.broadcast %9 : i32 to vector<1x256xi32>
    %11 = arith.remsi %7, %10 : vector<1x256xi32>
    %c0_i32_9 = arith.constant 0 : i32
    %12 = vector.broadcast %c0_i32_9 : i32 to vector<1x256xi32>
    %13 = arith.cmpi ne, %11, %12 : vector<1x256xi32>
    %c0_i32_10 = arith.constant 0 : i32
    %14 = vector.broadcast %c0_i32_10 : i32 to vector<1x256xi32>
    %15 = arith.cmpi slt, %11, %14 : vector<1x256xi32>
    %c0_i32_11 = arith.constant 0 : i32
    %16 = arith.cmpi slt, %9, %c0_i32_11 : i32
    %17 = vector.broadcast %16 : i1 to vector<1x256xi1>
    %18 = vector.broadcast %17 : vector<1x256xi1> to vector<1x256xi1>
    %19 = arith.xori %15, %18 : vector<1x256xi1>
    %20 = arith.andi %19, %13 : vector<1x256xi1>
    %21 = vector.broadcast %9 : i32 to vector<1x256xi32>
    %22 = arith.addi %11, %21 : vector<1x256xi32>
    %23 = arith.select %20, %22, %11 : vector<1x256xi1>, vector<1x256xi32>
    %c1_i32_12 = arith.constant 1 : i32
    %24 = vector.broadcast %c1_i32_12 : i32 to vector<1x256xi32>
    %25 = arith.cmpi sge, %23, %24 : vector<1x256xi32>
    %c14_i32 = arith.constant 14 : i32
    %26 = vector.broadcast %c14_i32 : i32 to vector<1x256xi32>
    %27 = arith.cmpi sle, %23, %26 : vector<1x256xi32>
    %c0_13 = arith.constant 0 : index
    %c0_14 = arith.constant 0 : index
    %c0_15 = arith.constant 0 : index
    %28 = vector.load %arg1[%c0_13, %c0_14, %c0_15] : memref<1x4x256xf32, #tpu.memory_space<vmem>>, vector<1x4x256xf32>
    %29 = vector.shape_cast %28 : vector<1x4x256xf32> to vector<4x256xf32>
    %30 = vector.broadcast %4 : vector<4x1xf32> to vector<4x256xf32>
    %31 = arith.mulf %29, %30 : vector<4x256xf32>
    %32 = vector.broadcast %5 : vector<4x1xf32> to vector<4x256xf32>
    %33 = arith.addf %31, %32 : vector<4x256xf32>
    %cst_16 = arith.constant 0.000000e+00 : f32
    %34 = vector.broadcast %cst_16 : f32 to vector<4x256xf32>
    %35 = arith.maximumf %33, %34 : vector<4x256xf32>
    %c0_17 = arith.constant 0 : index
    %c17 = arith.constant 17 : index
    %36 = vector.load %arg6[%c0_17, %c17] : memref<4x290xf32, #tpu.memory_space<vmem>>, vector<4x256xf32>
    tpu.vector_store %arg6[%c0_17, %c17], %35 {strides = array<i32>} : memref<4x290xf32, #tpu.memory_space<vmem>>, vector<4x256xf32>,
    %cst_18 = arith.constant 0.000000e+00 : f32
    %37 = vector.broadcast %cst_18 : f32 to vector<8x256xf32>
    %c0_19 = arith.constant 0 : index
    %c0_20 = arith.constant 0 : index
    %38 = vector.load %arg6[%c0_19, %c0_20] : memref<4x290xf32, #tpu.memory_space<vmem>>, vector<4x256xf32>
    %cst_21 = arith.constant 0.000000e+00 : f32
    %39 = vector.shape_cast %25 : vector<1x256xi1> to vector<1x256xi1>
    %40 = vector.broadcast %39 : vector<1x256xi1> to vector<4x256xi1>
    %41 = vector.broadcast %cst_21 : f32 to vector<4x256xf32>
    %42 = arith.select %40, %38, %41 : vector<4x256xi1>, vector<4x256xf32>
    %43 = vector.extract_strided_slice %6 {offsets = [0, 0], sizes = [8, 1], strides = [1, 1]} : vector<8x36xf32> to vector<8x1xf32>
    %44 = vector.extract_strided_slice %42 {offsets = [0, 0], sizes = [1, 256], strides = [1, 1]} : vector<4x256xf32> to vector<1x256xf32>
    %45 = vector.broadcast %43 : vector<8x1xf32> to vector<8x256xf32>
    %46 = vector.broadcast %44 : vector<1x256xf32> to vector<8x256xf32>
    %47 = arith.mulf %45, %46 : vector<8x256xf32>
    %48 = arith.addf %37, %47 : vector<8x256xf32>
    %49 = vector.extract_strided_slice %6 {offsets = [0, 1], sizes = [8, 1], strides = [1, 1]} : vector<8x36xf32> to vector<8x1xf32>
    %50 = vector.extract_strided_slice %42 {offsets = [1, 0], sizes = [1, 256], strides = [1, 1]} : vector<4x256xf32> to vector<1x256xf32>
    %51 = vector.broadcast %49 : vector<8x1xf32> to vector<8x256xf32>
    %52 = vector.broadcast %50 : vector<1x256xf32> to vector<8x256xf32>
    %53 = arith.mulf %51, %52 : vector<8x256xf32>
    %54 = arith.addf %48, %53 : vector<8x256xf32>
    %55 = vector.extract_strided_slice %6 {offsets = [0, 2], sizes = [8, 1], strides = [1, 1]} : vector<8x36xf32> to vector<8x1xf32>
    %56 = vector.extract_strided_slice %42 {offsets = [2, 0], sizes = [1, 256], strides = [1, 1]} : vector<4x256xf32> to vector<1x256xf32>
    %57 = vector.broadcast %55 : vector<8x1xf32> to vector<8x256xf32>
    %58 = vector.broadcast %56 : vector<1x256xf32> to vector<8x256xf32>
    %59 = arith.mulf %57, %58 : vector<8x256xf32>
    %60 = arith.addf %54, %59 : vector<8x256xf32>
    %61 = vector.extract_strided_slice %6 {offsets = [0, 3], sizes = [8, 1], strides = [1, 1]} : vector<8x36xf32> to vector<8x1xf32>
    %62 = vector.extract_strided_slice %42 {offsets = [3, 0], sizes = [1, 256], strides = [1, 1]} : vector<4x256xf32> to vector<1x256xf32>
    %63 = vector.broadcast %61 : vector<8x1xf32> to vector<8x256xf32>
    %64 = vector.broadcast %62 : vector<1x256xf32> to vector<8x256xf32>
    %65 = arith.mulf %63, %64 : vector<8x256xf32>
    %66 = arith.addf %60, %65 : vector<8x256xf32>
    %c0_22 = arith.constant 0 : index
    %c1 = arith.constant 1 : index
    %67 = vector.load %arg6[%c0_22, %c1] : memref<4x290xf32, #tpu.memory_space<vmem>>, vector<4x256xf32>
    %68 = vector.extract_strided_slice %6 {offsets = [0, 4], sizes = [8, 1], strides = [1, 1]} : vector<8x36xf32> to vector<8x1xf32>
    %69 = vector.extract_strided_slice %67 {offsets = [0, 0], sizes = [1, 256], strides = [1, 1]} : vector<4x256xf32> to vector<1x256xf32>
    %70 = vector.broadcast %68 : vector<8x1xf32> to vector<8x256xf32>
    %71 = vector.broadcast %69 : vector<1x256xf32> to vector<8x256xf32>
    %72 = arith.mulf %70, %71 : vector<8x256xf32>
    %73 = arith.addf %66, %72 : vector<8x256xf32>
    %74 = vector.extract_strided_slice %6 {offsets = [0, 5], sizes = [8, 1], strides = [1, 1]} : vector<8x36xf32> to vector<8x1xf32>
    %75 = vector.extract_strided_slice %67 {offsets = [1, 0], sizes = [1, 256], strides = [1, 1]} : vector<4x256xf32> to vector<1x256xf32>
    %76 = vector.broadcast %74 : vector<8x1xf32> to vector<8x256xf32>
    %77 = vector.broadcast %75 : vector<1x256xf32> to vector<8x256xf32>
    %78 = arith.mulf %76, %77 : vector<8x256xf32>
    %79 = arith.addf %73, %78 : vector<8x256xf32>
    %80 = vector.extract_strided_slice %6 {offsets = [0, 6], sizes = [8, 1], strides = [1, 1]} : vector<8x36xf32> to vector<8x1xf32>
    %81 = vector.extract_strided_slice %67 {offsets = [2, 0], sizes = [1, 256], strides = [1, 1]} : vector<4x256xf32> to vector<1x256xf32>
    %82 = vector.broadcast %80 : vector<8x1xf32> to vector<8x256xf32>
    %83 = vector.broadcast %81 : vector<1x256xf32> to vector<8x256xf32>
    %84 = arith.mulf %82, %83 : vector<8x256xf32>
    %85 = arith.addf %79, %84 : vector<8x256xf32>
    %86 = vector.extract_strided_slice %6 {offsets = [0, 7], sizes = [8, 1], strides = [1, 1]} : vector<8x36xf32> to vector<8x1xf32>
    %87 = vector.extract_strided_slice %67 {offsets = [3, 0], sizes = [1, 256], strides = [1, 1]} : vector<4x256xf32> to vector<1x256xf32>
    %88 = vector.broadcast %86 : vector<8x1xf32> to vector<8x256xf32>
    %89 = vector.broadcast %87 : vector<1x256xf32> to vector<8x256xf32>
    %90 = arith.mulf %88, %89 : vector<8x256xf32>
    %91 = arith.addf %85, %90 : vector<8x256xf32>
    %c0_23 = arith.constant 0 : index
    %c2 = arith.constant 2 : index
    %92 = vector.load %arg6[%c0_23, %c2] : memref<4x290xf32, #tpu.memory_space<vmem>>, vector<4x256xf32>
    %cst_24 = arith.constant 0.000000e+00 : f32
    %93 = vector.shape_cast %27 : vector<1x256xi1> to vector<1x256xi1>
    %94 = vector.broadcast %93 : vector<1x256xi1> to vector<4x256xi1>
    %95 = vector.broadcast %cst_24 : f32 to vector<4x256xf32>
    %96 = arith.select %94, %92, %95 : vector<4x256xi1>, vector<4x256xf32>
    %97 = vector.extract_strided_slice %6 {offsets = [0, 8], sizes = [8, 1], strides = [1, 1]} : vector<8x36xf32> to vector<8x1xf32>
    %98 = vector.extract_strided_slice %96 {offsets = [0, 0], sizes = [1, 256], strides = [1, 1]} : vector<4x256xf32> to vector<1x256xf32>
    %99 = vector.broadcast %97 : vector<8x1xf32> to vector<8x256xf32>
    %100 = vector.broadcast %98 : vector<1x256xf32> to vector<8x256xf32>
    %101 = arith.mulf %99, %100 : vector<8x256xf32>
    %102 = arith.addf %91, %101 : vector<8x256xf32>
    %103 = vector.extract_strided_slice %6 {offsets = [0, 9], sizes = [8, 1], strides = [1, 1]} : vector<8x36xf32> to vector<8x1xf32>
    %104 = vector.extract_strided_slice %96 {offsets = [1, 0], sizes = [1, 256], strides = [1, 1]} : vector<4x256xf32> to vector<1x256xf32>
    %105 = vector.broadcast %103 : vector<8x1xf32> to vector<8x256xf32>
    %106 = vector.broadcast %104 : vector<1x256xf32> to vector<8x256xf32>
    %107 = arith.mulf %105, %106 : vector<8x256xf32>
    %108 = arith.addf %102, %107 : vector<8x256xf32>
    %109 = vector.extract_strided_slice %6 {offsets = [0, 10], sizes = [8, 1], strides = [1, 1]} : vector<8x36xf32> to vector<8x1xf32>
    %110 = vector.extract_strided_slice %96 {offsets = [2, 0], sizes = [1, 256], strides = [1, 1]} : vector<4x256xf32> to vector<1x256xf32>
    %111 = vector.broadcast %109 : vector<8x1xf32> to vector<8x256xf32>
    %112 = vector.broadcast %110 : vector<1x256xf32> to vector<8x256xf32>
    %113 = arith.mulf %111, %112 : vector<8x256xf32>
    %114 = arith.addf %108, %113 : vector<8x256xf32>
    %115 = vector.extract_strided_slice %6 {offsets = [0, 11], sizes = [8, 1], strides = [1, 1]} : vector<8x36xf32> to vector<8x1xf32>
    %116 = vector.extract_strided_slice %96 {offsets = [3, 0], sizes = [1, 256], strides = [1, 1]} : vector<4x256xf32> to vector<1x256xf32>
    %117 = vector.broadcast %115 : vector<8x1xf32> to vector<8x256xf32>
    %118 = vector.broadcast %116 : vector<1x256xf32> to vector<8x256xf32>
    %119 = arith.mulf %117, %118 : vector<8x256xf32>
    %120 = arith.addf %114, %119 : vector<8x256xf32>
    %c0_25 = arith.constant 0 : index
    %c16 = arith.constant 16 : index
    %121 = vector.load %arg6[%c0_25, %c16] : memref<4x290xf32, #tpu.memory_space<vmem>>, vector<4x256xf32>
    %cst_26 = arith.constant 0.000000e+00 : f32
    %122 = vector.shape_cast %25 : vector<1x256xi1> to vector<1x256xi1>
    %123 = vector.broadcast %122 : vector<1x256xi1> to vector<4x256xi1>
    %124 = vector.broadcast %cst_26 : f32 to vector<4x256xf32>
    %125 = arith.select %123, %121, %124 : vector<4x256xi1>, vector<4x256xf32>
    %126 = vector.extract_strided_slice %6 {offsets = [0, 12], sizes = [8, 1], strides = [1, 1]} : vector<8x36xf32> to vector<8x1xf32>
    %127 = vector.extract_strided_slice %125 {offsets = [0, 0], sizes = [1, 256], strides = [1, 1]} : vector<4x256xf32> to vector<1x256xf32>
    %128 = vector.broadcast %126 : vector<8x1xf32> to vector<8x256xf32>
    %129 = vector.broadcast %127 : vector<1x256xf32> to vector<8x256xf32>
    %130 = arith.mulf %128, %129 : vector<8x256xf32>
    %131 = arith.addf %120, %130 : vector<8x256xf32>
    %132 = vector.extract_strided_slice %6 {offsets = [0, 13], sizes = [8, 1], strides = [1, 1]} : vector<8x36xf32> to vector<8x1xf32>
    %133 = vector.extract_strided_slice %125 {offsets = [1, 0], sizes = [1, 256], strides = [1, 1]} : vector<4x256xf32> to vector<1x256xf32>
    %134 = vector.broadcast %132 : vector<8x1xf32> to vector<8x256xf32>
    %135 = vector.broadcast %133 : vector<1x256xf32> to vector<8x256xf32>
    %136 = arith.mulf %134, %135 : vector<8x256xf32>
    %137 = arith.addf %131, %136 : vector<8x256xf32>
    %138 = vector.extract_strided_slice %6 {offsets = [0, 14], sizes = [8, 1], strides = [1, 1]} : vector<8x36xf32> to vector<8x1xf32>
    %139 = vector.extract_strided_slice %125 {offsets = [2, 0], sizes = [1, 256], strides = [1, 1]} : vector<4x256xf32> to vector<1x256xf32>
    %140 = vector.broadcast %138 : vector<8x1xf32> to vector<8x256xf32>
    %141 = vector.broadcast %139 : vector<1x256xf32> to vector<8x256xf32>
    %142 = arith.mulf %140, %141 : vector<8x256xf32>
    %143 = arith.addf %137, %142 : vector<8x256xf32>
    %144 = vector.extract_strided_slice %6 {offsets = [0, 15], sizes = [8, 1], strides = [1, 1]} : vector<8x36xf32> to vector<8x1xf32>
    %145 = vector.extract_strided_slice %125 {offsets = [3, 0], sizes = [1, 256], strides = [1, 1]} : vector<4x256xf32> to vector<1x256xf32>
    %146 = vector.broadcast %144 : vector<8x1xf32> to vector<8x256xf32>
    %147 = vector.broadcast %145 : vector<1x256xf32> to vector<8x256xf32>
    %148 = arith.mulf %146, %147 : vector<8x256xf32>
    %149 = arith.addf %143, %148 : vector<8x256xf32>
    %c0_27 = arith.constant 0 : index
    %c17_28 = arith.constant 17 : index
    %150 = vector.load %arg6[%c0_27, %c17_28] : memref<4x290xf32, #tpu.memory_space<vmem>>, vector<4x256xf32>
    %151 = vector.extract_strided_slice %6 {offsets = [0, 16], sizes = [8, 1], strides = [1, 1]} : vector<8x36xf32> to vector<8x1xf32>
    %152 = vector.extract_strided_slice %150 {offsets = [0, 0], sizes = [1, 256], strides = [1, 1]} : vector<4x256xf32> to vector<1x256xf32>
    %153 = vector.broadcast %151 : vector<8x1xf32> to vector<8x256xf32>
    %154 = vector.broadcast %152 : vector<1x256xf32> to vector<8x256xf32>
    %155 = arith.mulf %153, %154 : vector<8x256xf32>
    %156 = arith.addf %149, %155 : vector<8x256xf32>
    %157 = vector.extract_strided_slice %6 {offsets = [0, 17], sizes = [8, 1], strides = [1, 1]} : vector<8x36xf32> to vector<8x1xf32>
    %158 = vector.extract_strided_slice %150 {offsets = [1, 0], sizes = [1, 256], strides = [1, 1]} : vector<4x256xf32> to vector<1x256xf32>
    %159 = vector.broadcast %157 : vector<8x1xf32> to vector<8x256xf32>
    %160 = vector.broadcast %158 : vector<1x256xf32> to vector<8x256xf32>
    %161 = arith.mulf %159, %160 : vector<8x256xf32>
    %162 = arith.addf %156, %161 : vector<8x256xf32>
    %163 = vector.extract_strided_slice %6 {offsets = [0, 18], sizes = [8, 1], strides = [1, 1]} : vector<8x36xf32> to vector<8x1xf32>
    %164 = vector.extract_strided_slice %150 {offsets = [2, 0], sizes = [1, 256], strides = [1, 1]} : vector<4x256xf32> to vector<1x256xf32>
    %165 = vector.broadcast %163 : vector<8x1xf32> to vector<8x256xf32>
    %166 = vector.broadcast %164 : vector<1x256xf32> to vector<8x256xf32>
    %167 = arith.mulf %165, %166 : vector<8x256xf32>
    %168 = arith.addf %162, %167 : vector<8x256xf32>
    %169 = vector.extract_strided_slice %6 {offsets = [0, 19], sizes = [8, 1], strides = [1, 1]} : vector<8x36xf32> to vector<8x1xf32>
    %170 = vector.extract_strided_slice %150 {offsets = [3, 0], sizes = [1, 256], strides = [1, 1]} : vector<4x256xf32> to vector<1x256xf32>
    %171 = vector.broadcast %169 : vector<8x1xf32> to vector<8x256xf32>
    %172 = vector.broadcast %170 : vector<1x256xf32> to vector<8x256xf32>
    %173 = arith.mulf %171, %172 : vector<8x256xf32>
    %174 = arith.addf %168, %173 : vector<8x256xf32>
    %c0_29 = arith.constant 0 : index
    %c18 = arith.constant 18 : index
    %175 = vector.load %arg6[%c0_29, %c18] : memref<4x290xf32, #tpu.memory_space<vmem>>, vector<4x256xf32>
    %cst_30 = arith.constant 0.000000e+00 : f32
    %176 = vector.shape_cast %27 : vector<1x256xi1> to vector<1x256xi1>
    %177 = vector.broadcast %176 : vector<1x256xi1> to vector<4x256xi1>
    %178 = vector.broadcast %cst_30 : f32 to vector<4x256xf32>
    %179 = arith.select %177, %175, %178 : vector<4x256xi1>, vector<4x256xf32>
    %180 = vector.extract_strided_slice %6 {offsets = [0, 20], sizes = [8, 1], strides = [1, 1]} : vector<8x36xf32> to vector<8x1xf32>
    %181 = vector.extract_strided_slice %179 {offsets = [0, 0], sizes = [1, 256], strides = [1, 1]} : vector<4x256xf32> to vector<1x256xf32>
    %182 = vector.broadcast %180 : vector<8x1xf32> to vector<8x256xf32>
    %183 = vector.broadcast %181 : vector<1x256xf32> to vector<8x256xf32>
    %184 = arith.mulf %182, %183 : vector<8x256xf32>
    %185 = arith.addf %174, %184 : vector<8x256xf32>
    %186 = vector.extract_strided_slice %6 {offsets = [0, 21], sizes = [8, 1], strides = [1, 1]} : vector<8x36xf32> to vector<8x1xf32>
    %187 = vector.extract_strided_slice %179 {offsets = [1, 0], sizes = [1, 256], strides = [1, 1]} : vector<4x256xf32> to vector<1x256xf32>
    %188 = vector.broadcast %186 : vector<8x1xf32> to vector<8x256xf32>
    %189 = vector.broadcast %187 : vector<1x256xf32> to vector<8x256xf32>
    %190 = arith.mulf %188, %189 : vector<8x256xf32>
    %191 = arith.addf %185, %190 : vector<8x256xf32>
    %192 = vector.extract_strided_slice %6 {offsets = [0, 22], sizes = [8, 1], strides = [1, 1]} : vector<8x36xf32> to vector<8x1xf32>
    %193 = vector.extract_strided_slice %179 {offsets = [2, 0], sizes = [1, 256], strides = [1, 1]} : vector<4x256xf32> to vector<1x256xf32>
    %194 = vector.broadcast %192 : vector<8x1xf32> to vector<8x256xf32>
    %195 = vector.broadcast %193 : vector<1x256xf32> to vector<8x256xf32>
    %196 = arith.mulf %194, %195 : vector<8x256xf32>
    %197 = arith.addf %191, %196 : vector<8x256xf32>
    %198 = vector.extract_strided_slice %6 {offsets = [0, 23], sizes = [8, 1], strides = [1, 1]} : vector<8x36xf32> to vector<8x1xf32>
    %199 = vector.extract_strided_slice %179 {offsets = [3, 0], sizes = [1, 256], strides = [1, 1]} : vector<4x256xf32> to vector<1x256xf32>
    %200 = vector.broadcast %198 : vector<8x1xf32> to vector<8x256xf32>
    %201 = vector.broadcast %199 : vector<1x256xf32> to vector<8x256xf32>
    %202 = arith.mulf %200, %201 : vector<8x256xf32>
    %203 = arith.addf %197, %202 : vector<8x256xf32>
    %c0_31 = arith.constant 0 : index
    %c32 = arith.constant 32 : index
    %204 = vector.load %arg6[%c0_31, %c32] : memref<4x290xf32, #tpu.memory_space<vmem>>, vector<4x256xf32>
    %cst_32 = arith.constant 0.000000e+00 : f32
    %205 = vector.shape_cast %25 : vector<1x256xi1> to vector<1x256xi1>
    %206 = vector.broadcast %205 : vector<1x256xi1> to vector<4x256xi1>
    %207 = vector.broadcast %cst_32 : f32 to vector<4x256xf32>
    %208 = arith.select %206, %204, %207 : vector<4x256xi1>, vector<4x256xf32>
    %209 = vector.extract_strided_slice %6 {offsets = [0, 24], sizes = [8, 1], strides = [1, 1]} : vector<8x36xf32> to vector<8x1xf32>
    %210 = vector.extract_strided_slice %208 {offsets = [0, 0], sizes = [1, 256], strides = [1, 1]} : vector<4x256xf32> to vector<1x256xf32>
    %211 = vector.broadcast %209 : vector<8x1xf32> to vector<8x256xf32>
    %212 = vector.broadcast %210 : vector<1x256xf32> to vector<8x256xf32>
    %213 = arith.mulf %211, %212 : vector<8x256xf32>
    %214 = arith.addf %203, %213 : vector<8x256xf32>
    %215 = vector.extract_strided_slice %6 {offsets = [0, 25], sizes = [8, 1], strides = [1, 1]} : vector<8x36xf32> to vector<8x1xf32>
    %216 = vector.extract_strided_slice %208 {offsets = [1, 0], sizes = [1, 256], strides = [1, 1]} : vector<4x256xf32> to vector<1x256xf32>
    %217 = vector.broadcast %215 : vector<8x1xf32> to vector<8x256xf32>
    %218 = vector.broadcast %216 : vector<1x256xf32> to vector<8x256xf32>
    %219 = arith.mulf %217, %218 : vector<8x256xf32>
    %220 = arith.addf %214, %219 : vector<8x256xf32>
    %221 = vector.extract_strided_slice %6 {offsets = [0, 26], sizes = [8, 1], strides = [1, 1]} : vector<8x36xf32> to vector<8x1xf32>
    %222 = vector.extract_strided_slice %208 {offsets = [2, 0], sizes = [1, 256], strides = [1, 1]} : vector<4x256xf32> to vector<1x256xf32>
    %223 = vector.broadcast %221 : vector<8x1xf32> to vector<8x256xf32>
    %224 = vector.broadcast %222 : vector<1x256xf32> to vector<8x256xf32>
    %225 = arith.mulf %223, %224 : vector<8x256xf32>
    %226 = arith.addf %220, %225 : vector<8x256xf32>
    %227 = vector.extract_strided_slice %6 {offsets = [0, 27], sizes = [8, 1], strides = [1, 1]} : vector<8x36xf32> to vector<8x1xf32>
    %228 = vector.extract_strided_slice %208 {offsets = [3, 0], sizes = [1, 256], strides = [1, 1]} : vector<4x256xf32> to vector<1x256xf32>
    %229 = vector.broadcast %227 : vector<8x1xf32> to vector<8x256xf32>
    %230 = vector.broadcast %228 : vector<1x256xf32> to vector<8x256xf32>
    %231 = arith.mulf %229, %230 : vector<8x256xf32>
    %232 = arith.addf %226, %231 : vector<8x256xf32>
    %c0_33 = arith.constant 0 : index
    %c33 = arith.constant 33 : index
    %233 = vector.load %arg6[%c0_33, %c33] : memref<4x290xf32, #tpu.memory_space<vmem>>, vector<4x256xf32>
    %234 = vector.extract_strided_slice %6 {offsets = [0, 28], sizes = [8, 1], strides = [1, 1]} : vector<8x36xf32> to vector<8x1xf32>
    %235 = vector.extract_strided_slice %233 {offsets = [0, 0], sizes = [1, 256], strides = [1, 1]} : vector<4x256xf32> to vector<1x256xf32>
    %236 = vector.broadcast %234 : vector<8x1xf32> to vector<8x256xf32>
    %237 = vector.broadcast %235 : vector<1x256xf32> to vector<8x256xf32>
    %238 = arith.mulf %236, %237 : vector<8x256xf32>
    %239 = arith.addf %232, %238 : vector<8x256xf32>
    %240 = vector.extract_strided_slice %6 {offsets = [0, 29], sizes = [8, 1], strides = [1, 1]} : vector<8x36xf32> to vector<8x1xf32>
    %241 = vector.extract_strided_slice %233 {offsets = [1, 0], sizes = [1, 256], strides = [1, 1]} : vector<4x256xf32> to vector<1x256xf32>
    %242 = vector.broadcast %240 : vector<8x1xf32> to vector<8x256xf32>
    %243 = vector.broadcast %241 : vector<1x256xf32> to vector<8x256xf32>
    %244 = arith.mulf %242, %243 : vector<8x256xf32>
    %245 = arith.addf %239, %244 : vector<8x256xf32>
    %246 = vector.extract_strided_slice %6 {offsets = [0, 30], sizes = [8, 1], strides = [1, 1]} : vector<8x36xf32> to vector<8x1xf32>
    %247 = vector.extract_strided_slice %233 {offsets = [2, 0], sizes = [1, 256], strides = [1, 1]} : vector<4x256xf32> to vector<1x256xf32>
    %248 = vector.broadcast %246 : vector<8x1xf32> to vector<8x256xf32>
    %249 = vector.broadcast %247 : vector<1x256xf32> to vector<8x256xf32>
    %250 = arith.mulf %248, %249 : vector<8x256xf32>
    %251 = arith.addf %245, %250 : vector<8x256xf32>
    %252 = vector.extract_strided_slice %6 {offsets = [0, 31], sizes = [8, 1], strides = [1, 1]} : vector<8x36xf32> to vector<8x1xf32>
    %253 = vector.extract_strided_slice %233 {offsets = [3, 0], sizes = [1, 256], strides = [1, 1]} : vector<4x256xf32> to vector<1x256xf32>
    %254 = vector.broadcast %252 : vector<8x1xf32> to vector<8x256xf32>
    %255 = vector.broadcast %253 : vector<1x256xf32> to vector<8x256xf32>
    %256 = arith.mulf %254, %255 : vector<8x256xf32>
    %257 = arith.addf %251, %256 : vector<8x256xf32>
    %c0_34 = arith.constant 0 : index
    %c34 = arith.constant 34 : index
    %258 = vector.load %arg6[%c0_34, %c34] : memref<4x290xf32, #tpu.memory_space<vmem>>, vector<4x256xf32>
    %cst_35 = arith.constant 0.000000e+00 : f32
    %259 = vector.shape_cast %27 : vector<1x256xi1> to vector<1x256xi1>
    %260 = vector.broadcast %259 : vector<1x256xi1> to vector<4x256xi1>
    %261 = vector.broadcast %cst_35 : f32 to vector<4x256xf32>
    %262 = arith.select %260, %258, %261 : vector<4x256xi1>, vector<4x256xf32>
    %263 = vector.extract_strided_slice %6 {offsets = [0, 32], sizes = [8, 1], strides = [1, 1]} : vector<8x36xf32> to vector<8x1xf32>
    %264 = vector.extract_strided_slice %262 {offsets = [0, 0], sizes = [1, 256], strides = [1, 1]} : vector<4x256xf32> to vector<1x256xf32>
    %265 = vector.broadcast %263 : vector<8x1xf32> to vector<8x256xf32>
    %266 = vector.broadcast %264 : vector<1x256xf32> to vector<8x256xf32>
    %267 = arith.mulf %265, %266 : vector<8x256xf32>
    %268 = arith.addf %257, %267 : vector<8x256xf32>
    %269 = vector.extract_strided_slice %6 {offsets = [0, 33], sizes = [8, 1], strides = [1, 1]} : vector<8x36xf32> to vector<8x1xf32>
    %270 = vector.extract_strided_slice %262 {offsets = [1, 0], sizes = [1, 256], strides = [1, 1]} : vector<4x256xf32> to vector<1x256xf32>
    %271 = vector.broadcast %269 : vector<8x1xf32> to vector<8x256xf32>
    %272 = vector.broadcast %270 : vector<1x256xf32> to vector<8x256xf32>
    %273 = arith.mulf %271, %272 : vector<8x256xf32>
    %274 = arith.addf %268, %273 : vector<8x256xf32>
    %275 = vector.extract_strided_slice %6 {offsets = [0, 34], sizes = [8, 1], strides = [1, 1]} : vector<8x36xf32> to vector<8x1xf32>
    %276 = vector.extract_strided_slice %262 {offsets = [2, 0], sizes = [1, 256], strides = [1, 1]} : vector<4x256xf32> to vector<1x256xf32>
    %277 = vector.broadcast %275 : vector<8x1xf32> to vector<8x256xf32>
    %278 = vector.broadcast %276 : vector<1x256xf32> to vector<8x256xf32>
    %279 = arith.mulf %277, %278 : vector<8x256xf32>
    %280 = arith.addf %274, %279 : vector<8x256xf32>
    %281 = vector.extract_strided_slice %6 {offsets = [0, 35], sizes = [8, 1], strides = [1, 1]} : vector<8x36xf32> to vector<8x1xf32>
    %282 = vector.extract_strided_slice %262 {offsets = [3, 0], sizes = [1, 256], strides = [1, 1]} : vector<4x256xf32> to vector<1x256xf32>
    %283 = vector.broadcast %281 : vector<8x1xf32> to vector<8x256xf32>
    %284 = vector.broadcast %282 : vector<1x256xf32> to vector<8x256xf32>
    %285 = arith.mulf %283, %284 : vector<8x256xf32>
    %286 = arith.addf %280, %285 : vector<8x256xf32>
    %c0_36 = arith.constant 0 : index
    %c0_37 = arith.constant 0 : index
    %c0_38 = arith.constant 0 : index
    %287 = vector.load %arg5[%c0_36, %c0_37, %c0_38] : memref<1x12x256xf32, #tpu.memory_space<vmem>>, vector<1x4x256xf32>
    %288 = vector.shape_cast %287 : vector<1x4x256xf32> to vector<4x256xf32>
    %289 = vector.shape_cast %29 : vector<4x256xf32> to vector<1x4x256xf32>
    tpu.vector_store %arg5[%c0_36, %c0_37, %c0_38], %289 {strides = array<i32>} : memref<1x12x256xf32, #tpu.memory_space<vmem>>, vector<1x4x256xf32>,
    %c0_39 = arith.constant 0 : index
    %c4 = arith.constant 4 : index
    %c0_40 = arith.constant 0 : index
    %290 = vector.load %arg5[%c0_39, %c4, %c0_40] : memref<1x12x256xf32, #tpu.memory_space<vmem>>, vector<1x8x256xf32>
    %291 = vector.shape_cast %290 : vector<1x8x256xf32> to vector<8x256xf32>
    %292 = vector.shape_cast %286 : vector<8x256xf32> to vector<1x8x256xf32>
    tpu.vector_store %arg5[%c0_39, %c4, %c0_40], %292 {strides = array<i32>} : memref<1x12x256xf32, #tpu.memory_space<vmem>>, vector<1x8x256xf32>,
    return
  }
  func.func @transform_0(%arg0: i32) -> (i32, i32, i32) {
    %c0_i32 = arith.constant 0 : i32
    %c0_i32_0 = arith.constant 0 : i32
    %c0_i32_1 = arith.constant 0 : i32
    return %arg0, %c0_i32, %c0_i32_0 : i32, i32, i32
  }
  func.func @transform_1(%arg0: i32) -> (i32, i32) {
    %c0_i32 = arith.constant 0 : i32
    %c0_i32_0 = arith.constant 0 : i32
    %c0_i32_1 = arith.constant 0 : i32
    return %c0_i32, %c0_i32_0 : i32, i32
  }
  func.func @transform_2(%arg0: i32) -> (i32, i32) {
    %c0_i32 = arith.constant 0 : i32
    %c0_i32_0 = arith.constant 0 : i32
    %c0_i32_1 = arith.constant 0 : i32
    return %c0_i32, %c0_i32_0 : i32, i32
  }
  func.func @transform_3(%arg0: i32) -> (i32, i32) {
    %c0_i32 = arith.constant 0 : i32
    %c0_i32_0 = arith.constant 0 : i32
    %c0_i32_1 = arith.constant 0 : i32
    return %c0_i32, %c0_i32_0 : i32, i32
  }
  func.func @transform_4(%arg0: i32) -> (i32, i32, i32) {
    %c0_i32 = arith.constant 0 : i32
    %c0_i32_0 = arith.constant 0 : i32
    %c0_i32_1 = arith.constant 0 : i32
    return %arg0, %c0_i32, %c0_i32_0 : i32, i32, i32
  }
}

</mosaic_0001>

<llo_original>
// kernel: tpu_custom_call.1
$region0: #{tpu_custom_call.1}
  #allocation0 [shape = 'u32[]', space=smem, size = 0x4, offset = 0x4, fixed_abs, tag = 'smem constant byte address 0x4 - core index']
  #allocation1 [shape = 'u32[144,128]{1,0:T(1,128)}', space=vmem, size = 0x12000, scoped, tag = 'internal scratch']
  #allocation2 [shape = 'f32[4,290]{1,0:T(4,128)}', space=vmem, size = 0x1800, scoped, tag = 'scratch operand']
  %s0 = inlined_call_operand.hbm [shape: f32[2,4,256], index: 0, kind: input, shape index: {}]
  %s1 = inlined_call_operand.vmem [shape: f32[4,1], index: 1, kind: input, shape index: {}]
  %s2 = inlined_call_operand.vmem [shape: f32[4,1], index: 2, kind: input, shape index: {}]
  %s3 = inlined_call_operand.vmem [shape: f32[8,36], index: 3, kind: input, shape index: {}]
  %s4 = inlined_call_operand.vmem [shape: f32[2,12,256], index: 4, kind: output, shape index: {}]
  %s5 = sld [smem:[#allocation0]]
  $region53: #{tpu_custom_call.1} parent=0
    _
  %s7 = ssub.s32 1, %s5
  %s8 = scalar_select 0, %s7, %s5
  $region1: #{tpu_custom_call.1} parent=0
    #allocation3 [shape = 'u8[8192]{0}', space=vmem, size = 0x2000, scoped, tag = 'input window, operand 0']
    #allocation4 [shape = 's32[2]{0}', space=sflag, size = 0x8, scoped, tag = 'scoped memory for tpu_custom_call.1']
    %9 = vsyncpa [#allocation4], 0
    %s10 = scalar_lea.sflag [#allocation4], 1
    %11 = vsyncpa %s10, 0
    loop: start=0, step=1, limit=4
    $region2: #{tpu_custom_call.1} parent=1 // loop_pre_header
      _
    $region3: #{tpu_custom_call.1} parent=1 // loop_header
      %s13 = sphi 0, %s17
      %p14 = scmp.ge.s32.totalorder %s13, 4
      %s23 = sphi 0, %s25
      %s26 = sphi 0, %s23
      %s27 = sphi 0, %s26
      %s43 = sphi 0, %s27
      %s47 = sphi 0, %s47
      %s49 = sphi 0, %s47
      %s50 = sphi 0, %s49
      %s64 = sphi 0, %s50
      %s68 = sphi 0, %s68
      %s70 = sphi 0, %s68
      %s71 = sphi 0, %s70
      %s85 = sphi 0, %s71
      %s89 = sphi 0, %s89
      %s91 = sphi 0, %s89
      %s92 = sphi 0, %s91
      %s106 = sphi 0, %s92
      %s112 = sphi 0, %s114
      %s115 = sphi 0, %s112
      %s116 = sphi 0, %s115
      %s132 = sphi 0, %s116
    $region4: #{tpu_custom_call.1} parent=1 // loop_header_branch
      %16 = sbr.rel (%p14) target = $region8
    $region5: #{tpu_custom_call.1} parent=1 // loop_body
      %s18 = ssub.s32 %s13, 1
      %s19 = ssub.s32 %s13, 2
      %s20 = sadd.s32 %s13, 1
      %s21 = ssub.s32 %s13, %s20
      %p22 = scmp.eq.s32.totalorder %s21, 0
      %s24 = sadd.s32 %s23, 1
      %s25 = scalar_select %p22, %s23, %s24
      %p28 = pneg %p22
      %p29 = scmp.eq.s32.totalorder %s13, 1
      %p30 = por %p28, %p29
      %p31 = scmp.ne.s32.totalorder %s23, %s26
      %p32 = scmp.eq.s32.totalorder %s13, 0
      %p33 = por %p31, %p32
      %p34 = scmp.ne.s32.totalorder %s23, %s26
      %p35 = scmp.eq.s32.totalorder %s18, 1
      %p36 = por %p34, %p35
      %p37 = scmp.ne.s32.totalorder %s26, %s27
      %p38 = scmp.eq.s32.totalorder %s18, 0
      %p39 = por %p37, %p38
      %p40 = scmp.ne.s32.totalorder %s26, %s27
      %p41 = scmp.eq.s32.totalorder %s19, 1
      %p42 = por %p40, %p41
      %p44 = scmp.ne.s32.totalorder %s27, %s43
      %p45 = scmp.eq.s32.totalorder %s19, 0
      %p46 = por %p44, %p45
      %s48 = sadd.s32 %s47, 1
      %p51 = scmp.eq.s32.totalorder %s13, 1
      %p52 = scmp.ne.s32.totalorder %s47, %s49
      %p53 = scmp.eq.s32.totalorder %s13, 0
      %p54 = por %p52, %p53
      %p55 = scmp.ne.s32.totalorder %s47, %s49
      %p56 = scmp.eq.s32.totalorder %s18, 1
      %p57 = por %p55, %p56
      %p58 = scmp.ne.s32.totalorder %s49, %s50
      %p59 = scmp.eq.s32.totalorder %s18, 0
      %p60 = por %p58, %p59
      %p61 = scmp.ne.s32.totalorder %s49, %s50
      %p62 = scmp.eq.s32.totalorder %s19, 1
      %p63 = por %p61, %p62
      %p65 = scmp.ne.s32.totalorder %s50, %s64
      %p66 = scmp.eq.s32.totalorder %s19, 0
      %p67 = por %p65, %p66
      %s69 = sadd.s32 %s68, 1
      %p72 = scmp.eq.s32.totalorder %s13, 1
      %p73 = scmp.ne.s32.totalorder %s68, %s70
      %p74 = scmp.eq.s32.totalorder %s13, 0
      %p75 = por %p73, %p74
      %p76 = scmp.ne.s32.totalorder %s68, %s70
      %p77 = scmp.eq.s32.totalorder %s18, 1
      %p78 = por %p76, %p77
      %p79 = scmp.ne.s32.totalorder %s70, %s71
      %p80 = scmp.eq.s32.totalorder %s18, 0
      %p81 = por %p79, %p80
      %p82 = scmp.ne.s32.totalorder %s70, %s71
      %p83 = scmp.eq.s32.totalorder %s19, 1
      %p84 = por %p82, %p83
      %p86 = scmp.ne.s32.totalorder %s71, %s85
      %p87 = scmp.eq.s32.totalorder %s19, 0
      %p88 = por %p86, %p87
      %s90 = sadd.s32 %s89, 1
      %p93 = scmp.eq.s32.totalorder %s13, 1
      %p94 = scmp.ne.s32.totalorder %s89, %s91
      %p95 = scmp.eq.s32.totalorder %s13, 0
      %p96 = por %p94, %p95
      %p97 = scmp.ne.s32.totalorder %s89, %s91
      %p98 = scmp.eq.s32.totalorder %s18, 1
      %p99 = por %p97, %p98
      %p100 = scmp.ne.s32.totalorder %s91, %s92
      %p101 = scmp.eq.s32.totalorder %s18, 0
      %p102 = por %p100, %p101
      %p103 = scmp.ne.s32.totalorder %s91, %s92
      %p104 = scmp.eq.s32.totalorder %s19, 1
      %p105 = por %p103, %p104
      %p107 = scmp.ne.s32.totalorder %s92, %s106
      %p108 = scmp.eq.s32.totalorder %s19, 0
      %p109 = por %p107, %p108
      %s110 = ssub.s32 %s13, %s20
      %p111 = scmp.eq.s32.totalorder %s110, 0
      %s113 = sadd.s32 %s112, 1
      %s114 = scalar_select %p111, %s112, %s113
      %p117 = pneg %p111
      %p118 = scmp.eq.s32.totalorder %s13, 1
      %p119 = por %p117, %p118
      %p120 = scmp.ne.s32.totalorder %s112, %s115
      %p121 = scmp.eq.s32.totalorder %s13, 0
      %p122 = por %p120, %p121
      %p123 = scmp.ne.s32.totalorder %s112, %s115
      %p124 = scmp.eq.s32.totalorder %s18, 1
      %p125 = por %p123, %p124
      %p126 = scmp.ne.s32.totalorder %s115, %s116
      %p127 = scmp.eq.s32.totalorder %s18, 0
      %p128 = por %p126, %p127
      %p129 = scmp.ne.s32.totalorder %s115, %s116
      %p130 = scmp.eq.s32.totalorder %s19, 1
      %p131 = por %p129, %p130
      %p133 = scmp.ne.s32.totalorder %s116, %s132
      %p134 = scmp.eq.s32.totalorder %s19, 0
      %p135 = por %p133, %p134
      %p136 = scmp.le.s32.totalorder 1, %s13
      %p137 = scmp.lt.s32.totalorder %s13, 3
      %p138 = pnand %p136, %p137
      %p139 = pneg %p138
      // Predicated region
      $region9: #{tpu_custom_call.1} parent=5 // pred_check
        _
      $region10: #{tpu_custom_call.1} parent=5 // pred_check_branch
        %141 = sbr.rel (%p138) target = $region12
      $region11: #{tpu_custom_call.1} parent=5 // pred_region
        %s142 = ssub.s32 %s13, 1
        // Predicated region
        $region13: #{tpu_custom_call.1} parent=11 // pred_check
          %p143 = pneg %p60
        $region14: #{tpu_custom_call.1} parent=11 // pred_check_branch
          %145 = sbr.rel (%p143) target = $region16
        $region15: #{tpu_custom_call.1} parent=11 // pred_region
          _
        $region16: #{tpu_custom_call.1} parent=11 // pred_fallthru
          _
        // Predicated region
        $region17: #{tpu_custom_call.1} parent=11 // pred_check
          %p146 = pneg %p81
        $region18: #{tpu_custom_call.1} parent=11 // pred_check_branch
          %148 = sbr.rel (%p146) target = $region20
        $region19: #{tpu_custom_call.1} parent=11 // pred_region
          _
        $region20: #{tpu_custom_call.1} parent=11 // pred_fallthru
          _
        // Predicated region
        $region21: #{tpu_custom_call.1} parent=11 // pred_check
          %p149 = pneg %p102
        $region22: #{tpu_custom_call.1} parent=11 // pred_check_branch
          %151 = sbr.rel (%p149) target = $region24
        $region23: #{tpu_custom_call.1} parent=11 // pred_region
          _
        $region24: #{tpu_custom_call.1} parent=11 // pred_fallthru
          _
      $region12: #{tpu_custom_call.1} parent=5 // pred_fallthru
        _
      %p152 = scmp.lt.s32.totalorder %s13, 2
      // Predicated region
      $region25: #{tpu_custom_call.1} parent=5 // pred_check
        %p153 = pneg %p152
      $region26: #{tpu_custom_call.1} parent=5 // pred_check_branch
        %155 = sbr.rel (%p153) target = $region28
      $region27: #{tpu_custom_call.1} parent=5 // pred_region
        // Predicated region
        $region29: #{tpu_custom_call.1} parent=27 // pred_check
          %p156 = pneg %p33
        $region30: #{tpu_custom_call.1} parent=27 // pred_check_branch
          %158 = sbr.rel (%p156) target = $region32
        $region31: #{tpu_custom_call.1} parent=27 // pred_region
          %s159 = sand.u32 %s23, 1
          %s160 = scalar_lea.sflag [#allocation4], %s159
          %s161 = sand.u32 %s23, 1
          %s162 = smul.addr %s161, 8
          %s163 = scalar_lea.vmem [#allocation3], %s162
          %s165 = ssub.s32 128, 128
          %166 = vsyncadd %s160, %s165
          %s167 = smul.addr %s13, 2
          %s168 = smul.addr %s167, 64
          %s169 = scalar_lea.hbm %s0, %s168
          %s171 = sshll.u32 %s163, 4
          %s172 = int_to_ptr.vmem [resolvable:$true] %s171
          %174 = dma.hbm_to_vmem [thread:$0]  %s169, 128, %s172, %s160
        $region32: #{tpu_custom_call.1} parent=27 // pred_fallthru
          _
      $region28: #{tpu_custom_call.1} parent=5 // pred_fallthru
        _
      %p175 = scmp.le.s32.totalorder 1, %s13
      %p176 = scmp.lt.s32.totalorder %s13, 3
      %p177 = pnand %p175, %p176
      %p178 = pneg %p177
      // Predicated region
      $region33: #{tpu_custom_call.1} parent=5 // pred_check
        _
      $region34: #{tpu_custom_call.1} parent=5 // pred_check_branch
        %180 = sbr.rel (%p177) target = $region36
      $region35: #{tpu_custom_call.1} parent=5 // pred_region
        %s181 = ssub.s32 %s13, 1
        %s182 = sand.u32 %s26, 1
        %s183 = scalar_lea.sflag [#allocation4], %s182
        %s184 = sand.u32 %s26, 1
        %s185 = smul.addr %s184, 8
        %s186 = scalar_lea.vmem [#allocation3], %s185
        // Predicated region
        $region37: #{tpu_custom_call.1} parent=35 // pred_check
          %p187 = pneg %p39
        $region38: #{tpu_custom_call.1} parent=35 // pred_check_branch
          %189 = sbr.rel (%p187) target = $region40
        $region39: #{tpu_custom_call.1} parent=35 // pred_region
          %190 = dma.done %s183, 128
        $region40: #{tpu_custom_call.1} parent=35 // pred_fallthru
          _
        %s191 = sand.u32 %s26, 1
        %s192 = scalar_lea.sflag [#allocation4], %s191
        %s193 = sand.u32 %s26, 1
        %s194 = smul.addr %s193, 8
        %s195 = scalar_lea.vmem [#allocation3], %s194
        %p196 = pneg %p39
        %p197 = pneg %p36
        %p198 = pneg %p60
        %p199 = pneg %p57
        %p200 = pneg %p81
        %p201 = pneg %p78
        %p202 = pneg %p102
        %p203 = pneg %p99
        %p204 = pneg %p128
        %p205 = pneg %p125
        %p206 = scmp.lt.s32.totalorder %s18, 1
        %s207 = scalar_select %p206, %s18, 1
        %s208 = smul.addr %s207, 4
        %s209 = smul.addr %s208, 8
        %s210 = scalar_lea.vmem %s4, %s209
        %p211 = scmp.lt.s32.totalorder %s18, 1
        %s212 = scalar_select %p211, %s18, 1
        %s213 = smul.addr %s212, 4
        %s214 = smul.addr %s213, 8
        %s215 = scalar_lea.vmem %s4, %s214
        %vm216 = vcmask 134144
        %217 = vst.msk [vmem:[#allocation2] sm:$0xf] %vm216, 0.0
        %vm218 = vcmask 273544
        %219 = vst.msk [vmem:[#allocation2 + $0x8] sm:$0xf] %vm218, 0.0
        %v220 = vld [vmem:[%s1] sm:$0xf]
        %v221 = vld [vmem:[%s2] sm:$0xf]
        %v222 = vld [vmem:[%s3] sm:$0xff]
        %v223 = vlaneseq
        %v224 = vand.u32 %v223, 127
        %v225 = vadd.s32 %v224, 128
        %vm226 = vcmp.lt.s32.totalorder %v224, 0
        %v227 = vsub.s32 0, %v224
        %v228 = vsel %vm226, %v227, %v224
        %v229 = vshrl.u32 %v228, 4
        %v230 = vand.u32 %v228, 15
        %v231 = vsub.s32 0, %v230
        %v232 = vsel %vm226, %v231, %v230
        %vm233 = vcmp.lt.s32.totalorder %v225, 0
        %v234 = vsub.s32 0, %v225
        %v235 = vsel %vm233, %v234, %v225
        %v236 = vshrl.u32 %v235, 4
        %v237 = vand.u32 %v235, 15
        %v238 = vsub.s32 0, %v237
        %v239 = vsel %vm233, %v238, %v237
        %vm240 = vcmp.ne.s32.totalorder %v232, 0
        %vm241 = vcmp.ne.s32.totalorder %v239, 0
        %vm242 = vcmp.lt.s32.totalorder %v232, 0
        %vm243 = vcmp.lt.s32.totalorder %v239, 0
        %vm244 = vmand %vm242, %vm240
        %vm245 = vmand %vm243, %vm241
        %v246 = vadd.s32 %v232, 16
        %v247 = vadd.s32 %v239, 16
        %v248 = vsel %vm244, %v246, %v232
        %v249 = vsel %vm245, %v247, %v239
        %vm250 = vcmp.ge.s32.totalorder %v248, 1
        %vm251 = vcmp.ge.s32.totalorder %v249, 1
        %vm252 = vcmp.le.s32.totalorder %v248, 14
        %vm253 = vcmp.le.s32.totalorder %v249, 14
        %v254 = vld [vmem:[%s186] sm:$0xff]
        %256 = vset.pattern.permute.xlu0 0
        %257 = vperm.xlu0 %256, %v220
        %v258 = vpop.permute.xlu0 %257
        %v260 = vunpack.c.l.s4 839922192
        %v261 = vunpack.c.0.s8 %v260
        %v262 = vlaneseq
        %v263 = vshrl.u32 %v262, 7
        %v264 = vsub.s32 %v261, %v263
        %v265 = vrot.slane %v258, %v264
        %v267 = vmul.f32 %v254, %v265
        %269 = vset.pattern.permute.xlu0 0
        %270 = vperm.xlu0 %269, %v221
        %v271 = vpop.permute.xlu0 %270
        %v273 = vunpack.c.l.s4 839922192
        %v274 = vunpack.c.0.s8 %v273
        %v275 = vlaneseq
        %v276 = vshrl.u32 %v275, 7
        %v277 = vsub.s32 %v274, %v276
        %v278 = vrot.slane %v271, %v277
        %v280 = vadd.f32 %v267, %v278
        %v281 = vmax.f32 %v280, 0.0
        %283 = vrot.lane.b32.xlu0 %v281, 17
        %v284 = vpop.permute.xlu0 %283
        %v285 = vrot.slane %v284, 4
        %vm286 = vcmask 138240
        %v287 = vsel %vm286, %v285, %v284
        %vm290 = vcmask 1043592
        %vm291 = vcmask 1047556
        %vm292 = vmor %vm291, %vm290
        %293 = vst.msk [vmem:[#allocation2] sm:$0xff] %vm292, %v287
        %294 = vst.msk [vmem:[#allocation2 + $0x8] sm:$0xf] %vm216, %v285
        %v295 = vld [vmem:[#allocation2] sm:$0xff]
        %v296 = vsel %vm250, 1, 0
        %v297 = vsel %vm251, 1, 0
        %vm298 = vcmp.eq.s32.totalorder %v296, 1
        %vm299 = vcmp.eq.s32.totalorder %v297, 1
        %v301 = vcombine.high %v295, %v295
        %v303 = vsel %vm298, %v295, 0.0
        %v304 = vsel %vm299, %v301, 0.0
        %306 = vset.pattern.permute.xlu0 0
        %307 = vperm.xlu0 %306, %v222
        %v308 = vpop.permute.xlu0 %307
        %v310 = vlaneseq
        %v311 = vshrl.u32 %v310, 7
        %v312 = vsub.s32 0, %v311
        %v313 = vrot.slane %v303, %v312
        %v314 = vlaneseq
        %v315 = vshrl.u32 %v314, 7
        %v316 = vsub.s32 0, %v315
        %v317 = vrot.slane %v304, %v316
        %v318 = vmul.f32 %v308, %v313
        %v319 = vmul.f32 %v308, %v317
        %v320 = vadd.f32 %v318, 0.0
        %v321 = vadd.f32 %v319, 0.0
        %322 = vset.pattern.permute.xlu0 1
        %323 = vperm.xlu0 %322, %v222
        %v324 = vpop.permute.xlu0 %323
        %v326 = vlaneseq
        %v327 = vshrl.u32 %v326, 7
        %v328 = vsub.s32 1, %v327
        %v329 = vrot.slane %v303, %v328
        %v330 = vlaneseq
        %v331 = vshrl.u32 %v330, 7
        %v332 = vsub.s32 1, %v331
        %v333 = vrot.slane %v304, %v332
        %v334 = vmul.f32 %v324, %v329
        %v335 = vmul.f32 %v324, %v333
        %v336 = vadd.f32 %v320, %v334
        %v337 = vadd.f32 %v321, %v335
        %338 = vset.pattern.permute.xlu0 2
        %339 = vperm.xlu0 %338, %v222
        %v340 = vpop.permute.xlu0 %339
        %v342 = vlaneseq
        %v343 = vshrl.u32 %v342, 7
        %v344 = vsub.s32 2, %v343
        %v345 = vrot.slane %v303, %v344
        %v346 = vlaneseq
        %v347 = vshrl.u32 %v346, 7
        %v348 = vsub.s32 2, %v347
        %v349 = vrot.slane %v304, %v348
        %v350 = vmul.f32 %v340, %v345
        %v351 = vmul.f32 %v340, %v349
        %v352 = vadd.f32 %v336, %v350
        %v353 = vadd.f32 %v337, %v351
        %354 = vset.pattern.permute.xlu0 3
        %355 = vperm.xlu0 %354, %v222
        %v356 = vpop.permute.xlu0 %355
        %v358 = vlaneseq
        %v359 = vshrl.u32 %v358, 7
        %v360 = vsub.s32 3, %v359
        %v361 = vrot.slane %v303, %v360
        %v362 = vlaneseq
        %v363 = vshrl.u32 %v362, 7
        %v364 = vsub.s32 3, %v363
        %v365 = vrot.slane %v304, %v364
        %v366 = vmul.f32 %v356, %v361
        %v367 = vmul.f32 %v356, %v365
        %v368 = vadd.f32 %v352, %v366
        %v369 = vadd.f32 %v353, %v367
        %v370 = vld [vmem:[#allocation2] sm:$0xff]
        %v371 = vld [vmem:[#allocation2 + $0x8] sm:$0xf]
        %372 = vset.pattern.permute.xlu0 4
        %373 = vperm.xlu0 %372, %v222
        %v374 = vpop.permute.xlu0 %373
        %v378 = vlaneseq
        %v379 = vshrl.u32 %v378, 7
        %v380 = vsub.s32 0, %v379
        %v381 = vrot.slane %v370, %v380
        %v382 = vlaneseq
        %v383 = vshrl.u32 %v382, 7
        %v384 = vsub.s32 4, %v383
        %v385 = vrot.slane %v370, %v384
        %v386 = vlaneseq
        %v387 = vshrl.u32 %v386, 7
        %v388 = vsub.s32 0, %v387
        %v389 = vrot.slane %v371, %v388
        %v393 = vlaneseq
        %v394 = vshrl.u32 %v393, 7
        %v395 = vsub.s32 0, %v394
        %v396 = vrot.slane %v381, %v395
        %v397 = vlaneseq
        %v398 = vshrl.u32 %v397, 7
        %v399 = vsub.s32 0, %v398
        %v400 = vrot.slane %v385, %v399
        %v401 = vlaneseq
        %v402 = vshrl.u32 %v401, 7
        %v403 = vsub.s32 0, %v402
        %v404 = vrot.slane %v389, %v403
        %v405 = vmul.f32 %v374, %v396
        %v406 = vmul.f32 %v374, %v400
        %v407 = vmul.f32 %v374, %v404
        %411 = vrot.lane.b32.xlu0 %v405, 127
        %v412 = vpop.permute.xlu0 %411
        %413 = vrot.lane.b32.xlu0 %v406, 127
        %v414 = vpop.permute.xlu0 %413
        %415 = vrot.lane.b32.xlu0 %v407, 127
        %v416 = vpop.permute.xlu0 %415
        %vm417 = vcmask 1039360
        %v418 = vsel %vm417, %v412, %v414
        %v419 = vsel %vm417, %v414, %v416
        %v422 = vadd.f32 %v368, %v418
        %v423 = vadd.f32 %v369, %v419
        %424 = vset.pattern.permute.xlu0 5
        %425 = vperm.xlu0 %424, %v222
        %v426 = vpop.permute.xlu0 %425
        %v428 = vlaneseq
        %v429 = vshrl.u32 %v428, 7
        %v430 = vsub.s32 1, %v429
        %v431 = vrot.slane %v370, %v430
        %v432 = vlaneseq
        %v433 = vshrl.u32 %v432, 7
        %v434 = vsub.s32 5, %v433
        %v435 = vrot.slane %v370, %v434
        %v436 = vlaneseq
        %v437 = vshrl.u32 %v436, 7
        %v438 = vsub.s32 1, %v437
        %v439 = vrot.slane %v371, %v438
        %v443 = vlaneseq
        %v444 = vshrl.u32 %v443, 7
        %v445 = vsub.s32 1, %v444
        %v446 = vrot.slane %v431, %v445
        %v447 = vlaneseq
        %v448 = vshrl.u32 %v447, 7
        %v449 = vsub.s32 1, %v448
        %v450 = vrot.slane %v435, %v449
        %v451 = vlaneseq
        %v452 = vshrl.u32 %v451, 7
        %v453 = vsub.s32 1, %v452
        %v454 = vrot.slane %v439, %v453
        %v455 = vmul.f32 %v426, %v446
        %v456 = vmul.f32 %v426, %v450
        %v457 = vmul.f32 %v426, %v454
        %461 = vrot.lane.b32.xlu0 %v455, 127
        %v462 = vpop.permute.xlu0 %461
        %463 = vrot.lane.b32.xlu0 %v456, 127
        %v464 = vpop.permute.xlu0 %463
        %465 = vrot.lane.b32.xlu0 %v457, 127
        %v466 = vpop.permute.xlu0 %465
        %v467 = vsel %vm417, %v462, %v464
        %v468 = vsel %vm417, %v464, %v466
        %v471 = vadd.f32 %v422, %v467
        %v472 = vadd.f32 %v423, %v468
        %473 = vset.pattern.permute.xlu0 6
        %474 = vperm.xlu0 %473, %v222
        %v475 = vpop.permute.xlu0 %474
        %v477 = vlaneseq
        %v478 = vshrl.u32 %v477, 7
        %v479 = vsub.s32 2, %v478
        %v480 = vrot.slane %v370, %v479
        %v481 = vlaneseq
        %v482 = vshrl.u32 %v481, 7
        %v483 = vsub.s32 6, %v482
        %v484 = vrot.slane %v370, %v483
        %v485 = vlaneseq
        %v486 = vshrl.u32 %v485, 7
        %v487 = vsub.s32 2, %v486
        %v488 = vrot.slane %v371, %v487
        %v492 = vlaneseq
        %v493 = vshrl.u32 %v492, 7
        %v494 = vsub.s32 2, %v493
        %v495 = vrot.slane %v480, %v494
        %v496 = vlaneseq
        %v497 = vshrl.u32 %v496, 7
        %v498 = vsub.s32 2, %v497
        %v499 = vrot.slane %v484, %v498
        %v500 = vlaneseq
        %v501 = vshrl.u32 %v500, 7
        %v502 = vsub.s32 2, %v501
        %v503 = vrot.slane %v488, %v502
        %v504 = vmul.f32 %v475, %v495
        %v505 = vmul.f32 %v475, %v499
        %v506 = vmul.f32 %v475, %v503
        %510 = vrot.lane.b32.xlu0 %v504, 127
        %v511 = vpop.permute.xlu0 %510
        %512 = vrot.lane.b32.xlu0 %v505, 127
        %v513 = vpop.permute.xlu0 %512
        %514 = vrot.lane.b32.xlu0 %v506, 127
        %v515 = vpop.permute.xlu0 %514
        %v516 = vsel %vm417, %v511, %v513
        %v517 = vsel %vm417, %v513, %v515
        %v520 = vadd.f32 %v471, %v516
        %v521 = vadd.f32 %v472, %v517
        %522 = vset.pattern.permute.xlu0 7
        %523 = vperm.xlu0 %522, %v222
        %v524 = vpop.permute.xlu0 %523
        %v526 = vlaneseq
        %v527 = vshrl.u32 %v526, 7
        %v528 = vsub.s32 3, %v527
        %v529 = vrot.slane %v370, %v528
        %v530 = vlaneseq
        %v531 = vshrl.u32 %v530, 7
        %v532 = vsub.s32 7, %v531
        %v533 = vrot.slane %v370, %v532
        %v534 = vlaneseq
        %v535 = vshrl.u32 %v534, 7
        %v536 = vsub.s32 3, %v535
        %v537 = vrot.slane %v371, %v536
        %v541 = vlaneseq
        %v542 = vshrl.u32 %v541, 7
        %v543 = vsub.s32 3, %v542
        %v544 = vrot.slane %v529, %v543
        %v545 = vlaneseq
        %v546 = vshrl.u32 %v545, 7
        %v547 = vsub.s32 3, %v546
        %v548 = vrot.slane %v533, %v547
        %v549 = vlaneseq
        %v550 = vshrl.u32 %v549, 7
        %v551 = vsub.s32 3, %v550
        %v552 = vrot.slane %v537, %v551
        %v553 = vmul.f32 %v524, %v544
        %v554 = vmul.f32 %v524, %v548
        %v555 = vmul.f32 %v524, %v552
        %559 = vrot.lane.b32.xlu0 %v553, 127
        %v560 = vpop.permute.xlu0 %559
        %561 = vrot.lane.b32.xlu0 %v554, 127
        %v562 = vpop.permute.xlu0 %561
        %563 = vrot.lane.b32.xlu0 %v555, 127
        %v564 = vpop.permute.xlu0 %563
        %v565 = vsel %vm417, %v560, %v562
        %v566 = vsel %vm417, %v562, %v564
        %v569 = vadd.f32 %v520, %v565
        %v570 = vadd.f32 %v521, %v566
        %v571 = vsel %vm252, 1, 0
        %v572 = vsel %vm253, 1, 0
        %vm573 = vcmp.eq.s32.totalorder %v571, 1
        %vm574 = vcmp.eq.s32.totalorder %v572, 1
        %v575 = vcombine.high %v370, %v370
        %576 = vrot.lane.b32.xlu0 %v370, 126
        %v577 = vpop.permute.xlu0 %576
        %578 = vrot.lane.b32.xlu0 %v575, 126
        %v579 = vpop.permute.xlu0 %578
        %580 = vrot.lane.b32.xlu0 %v371, 126
        %v581 = vpop.permute.xlu0 %580
        %vm582 = vcmask 1031168
        %v583 = vsel %vm582, %v577, %v579
        %v584 = vsel %vm582, %v579, %v581
        %v587 = vsel %vm573, %v583, 0.0
        %v588 = vsel %vm574, %v584, 0.0
        %589 = vset.pattern.permute.xlu0 8
        %590 = vperm.xlu0 %589, %v222
        %v591 = vpop.permute.xlu0 %590
        %v593 = vlaneseq
        %v594 = vshrl.u32 %v593, 7
        %v595 = vsub.s32 0, %v594
        %v596 = vrot.slane %v587, %v595
        %v597 = vlaneseq
        %v598 = vshrl.u32 %v597, 7
        %v599 = vsub.s32 0, %v598
        %v600 = vrot.slane %v588, %v599
        %v601 = vmul.f32 %v591, %v596
        %v602 = vmul.f32 %v591, %v600
        %v603 = vadd.f32 %v569, %v601
        %v604 = vadd.f32 %v570, %v602
        %605 = vset.pattern.permute.xlu0 9
        %606 = vperm.xlu0 %605, %v222
        %v607 = vpop.permute.xlu0 %606
        %v609 = vlaneseq
        %v610 = vshrl.u32 %v609, 7
        %v611 = vsub.s32 1, %v610
        %v612 = vrot.slane %v587, %v611
        %v613 = vlaneseq
        %v614 = vshrl.u32 %v613, 7
        %v615 = vsub.s32 1, %v614
        %v616 = vrot.slane %v588, %v615
        %v617 = vmul.f32 %v607, %v612
        %v618 = vmul.f32 %v607, %v616
        %v619 = vadd.f32 %v603, %v617
        %v620 = vadd.f32 %v604, %v618
        %621 = vset.pattern.permute.xlu0 10
        %622 = vperm.xlu0 %621, %v222
        %v623 = vpop.permute.xlu0 %622
        %v625 = vlaneseq
        %v626 = vshrl.u32 %v625, 7
        %v627 = vsub.s32 2, %v626
        %v628 = vrot.slane %v587, %v627
        %v629 = vlaneseq
        %v630 = vshrl.u32 %v629, 7
        %v631 = vsub.s32 2, %v630
        %v632 = vrot.slane %v588, %v631
        %v633 = vmul.f32 %v623, %v628
        %v634 = vmul.f32 %v623, %v632
        %v635 = vadd.f32 %v619, %v633
        %v636 = vadd.f32 %v620, %v634
        %637 = vset.pattern.permute.xlu0 11
        %638 = vperm.xlu0 %637, %v222
        %v639 = vpop.permute.xlu0 %638
        %v641 = vlaneseq
        %v642 = vshrl.u32 %v641, 7
        %v643 = vsub.s32 3, %v642
        %v644 = vrot.slane %v587, %v643
        %v645 = vlaneseq
        %v646 = vshrl.u32 %v645, 7
        %v647 = vsub.s32 3, %v646
        %v648 = vrot.slane %v588, %v647
        %v649 = vmul.f32 %v639, %v644
        %v650 = vmul.f32 %v639, %v648
        %v651 = vadd.f32 %v635, %v649
        %v652 = vadd.f32 %v636, %v650
        %v653 = vld [vmem:[#allocation2] sm:$0xff]
        %v654 = vld [vmem:[#allocation2 + $0x8] sm:$0xf]
        %v657 = vcombine.high %v653, %v653
        %658 = vrot.lane.b32.xlu0 %v653, 112
        %v659 = vpop.permute.xlu0 %658
        %660 = vrot.lane.b32.xlu0 %v657, 112
        %v661 = vpop.permute.xlu0 %660
        %662 = vrot.lane.b32.xlu0 %v654, 112
        %v663 = vpop.permute.xlu0 %662
        %vm664 = vcmask 916480
        %v665 = vsel %vm664, %v659, %v661
        %v666 = vsel %vm664, %v661, %v663
        %v669 = vsel %vm298, %v665, 0.0
        %v670 = vsel %vm299, %v666, 0.0
        %671 = vset.pattern.permute.xlu0 12
        %672 = vperm.xlu0 %671, %v222
        %v673 = vpop.permute.xlu0 %672
        %v675 = vlaneseq
        %v676 = vshrl.u32 %v675, 7
        %v677 = vsub.s32 0, %v676
        %v678 = vrot.slane %v669, %v677
        %v679 = vlaneseq
        %v680 = vshrl.u32 %v679, 7
        %v681 = vsub.s32 0, %v680
        %v682 = vrot.slane %v670, %v681
        %v683 = vmul.f32 %v673, %v678
        %v684 = vmul.f32 %v673, %v682
        %v685 = vadd.f32 %v651, %v683
        %v686 = vadd.f32 %v652, %v684
        %687 = vset.pattern.permute.xlu0 13
        %688 = vperm.xlu0 %687, %v222
        %v689 = vpop.permute.xlu0 %688
        %v691 = vlaneseq
        %v692 = vshrl.u32 %v691, 7
        %v693 = vsub.s32 1, %v692
        %v694 = vrot.slane %v669, %v693
        %v695 = vlaneseq
        %v696 = vshrl.u32 %v695, 7
        %v697 = vsub.s32 1, %v696
        %v698 = vrot.slane %v670, %v697
        %v699 = vmul.f32 %v689, %v694
        %v700 = vmul.f32 %v689, %v698
        %v701 = vadd.f32 %v685, %v699
        %v702 = vadd.f32 %v686, %v700
        %703 = vset.pattern.permute.xlu0 14
        %704 = vperm.xlu0 %703, %v222
        %v705 = vpop.permute.xlu0 %704
        %v707 = vlaneseq
        %v708 = vshrl.u32 %v707, 7
        %v709 = vsub.s32 2, %v708
        %v710 = vrot.slane %v669, %v709
        %v711 = vlaneseq
        %v712 = vshrl.u32 %v711, 7
        %v713 = vsub.s32 2, %v712
        %v714 = vrot.slane %v670, %v713
        %v715 = vmul.f32 %v705, %v710
        %v716 = vmul.f32 %v705, %v714
        %v717 = vadd.f32 %v701, %v715
        %v718 = vadd.f32 %v702, %v716
        %719 = vset.pattern.permute.xlu0 15
        %720 = vperm.xlu0 %719, %v222
        %v721 = vpop.permute.xlu0 %720
        %v723 = vlaneseq
        %v724 = vshrl.u32 %v723, 7
        %v725 = vsub.s32 3, %v724
        %v726 = vrot.slane %v669, %v725
        %v727 = vlaneseq
        %v728 = vshrl.u32 %v727, 7
        %v729 = vsub.s32 3, %v728
        %v730 = vrot.slane %v670, %v729
        %v731 = vmul.f32 %v721, %v726
        %v732 = vmul.f32 %v721, %v730
        %v733 = vadd.f32 %v717, %v731
        %v734 = vadd.f32 %v718, %v732
        %v735 = vld [vmem:[#allocation2] sm:$0xff]
        %v736 = vld [vmem:[#allocation2 + $0x8] sm:$0xf]
        %737 = vset.pattern.permute.xlu0 16
        %738 = vperm.xlu0 %737, %v222
        %v739 = vpop.permute.xlu0 %738
        %v743 = vlaneseq
        %v744 = vshrl.u32 %v743, 7
        %v745 = vsub.s32 0, %v744
        %v746 = vrot.slane %v735, %v745
        %v747 = vlaneseq
        %v748 = vshrl.u32 %v747, 7
        %v749 = vsub.s32 4, %v748
        %v750 = vrot.slane %v735, %v749
        %v751 = vlaneseq
        %v752 = vshrl.u32 %v751, 7
        %v753 = vsub.s32 0, %v752
        %v754 = vrot.slane %v736, %v753
        %v758 = vlaneseq
        %v759 = vshrl.u32 %v758, 7
        %v760 = vsub.s32 0, %v759
        %v761 = vrot.slane %v746, %v760
        %v762 = vlaneseq
        %v763 = vshrl.u32 %v762, 7
        %v764 = vsub.s32 0, %v763
        %v765 = vrot.slane %v750, %v764
        %v766 = vlaneseq
        %v767 = vshrl.u32 %v766, 7
        %v768 = vsub.s32 0, %v767
        %v769 = vrot.slane %v754, %v768
        %v770 = vmul.f32 %v739, %v761
        %v771 = vmul.f32 %v739, %v765
        %v772 = vmul.f32 %v739, %v769
        %776 = vrot.lane.b32.xlu0 %v770, 111
        %v777 = vpop.permute.xlu0 %776
        %778 = vrot.lane.b32.xlu0 %v771, 111
        %v779 = vpop.permute.xlu0 %778
        %780 = vrot.lane.b32.xlu0 %v772, 111
        %v781 = vpop.permute.xlu0 %780
        %vm782 = vcmask 908288
        %v783 = vsel %vm782, %v777, %v779
        %v784 = vsel %vm782, %v779, %v781
        %v787 = vadd.f32 %v733, %v783
        %v788 = vadd.f32 %v734, %v784
        %789 = vset.pattern.permute.xlu0 17
        %790 = vperm.xlu0 %789, %v222
        %v791 = vpop.permute.xlu0 %790
        %v793 = vlaneseq
        %v794 = vshrl.u32 %v793, 7
        %v795 = vsub.s32 1, %v794
        %v796 = vrot.slane %v735, %v795
        %v797 = vlaneseq
        %v798 = vshrl.u32 %v797, 7
        %v799 = vsub.s32 5, %v798
        %v800 = vrot.slane %v735, %v799
        %v801 = vlaneseq
        %v802 = vshrl.u32 %v801, 7
        %v803 = vsub.s32 1, %v802
        %v804 = vrot.slane %v736, %v803
        %v808 = vlaneseq
        %v809 = vshrl.u32 %v808, 7
        %v810 = vsub.s32 1, %v809
        %v811 = vrot.slane %v796, %v810
        %v812 = vlaneseq
        %v813 = vshrl.u32 %v812, 7
        %v814 = vsub.s32 1, %v813
        %v815 = vrot.slane %v800, %v814
        %v816 = vlaneseq
        %v817 = vshrl.u32 %v816, 7
        %v818 = vsub.s32 1, %v817
        %v819 = vrot.slane %v804, %v818
        %v820 = vmul.f32 %v791, %v811
        %v821 = vmul.f32 %v791, %v815
        %v822 = vmul.f32 %v791, %v819
        %826 = vrot.lane.b32.xlu0 %v820, 111
        %v827 = vpop.permute.xlu0 %826
        %828 = vrot.lane.b32.xlu0 %v821, 111
        %v829 = vpop.permute.xlu0 %828
        %830 = vrot.lane.b32.xlu0 %v822, 111
        %v831 = vpop.permute.xlu0 %830
        %v832 = vsel %vm782, %v827, %v829
        %v833 = vsel %vm782, %v829, %v831
        %v836 = vadd.f32 %v787, %v832
        %v837 = vadd.f32 %v788, %v833
        %838 = vset.pattern.permute.xlu0 18
        %839 = vperm.xlu0 %838, %v222
        %v840 = vpop.permute.xlu0 %839
        %v842 = vlaneseq
        %v843 = vshrl.u32 %v842, 7
        %v844 = vsub.s32 2, %v843
        %v845 = vrot.slane %v735, %v844
        %v846 = vlaneseq
        %v847 = vshrl.u32 %v846, 7
        %v848 = vsub.s32 6, %v847
        %v849 = vrot.slane %v735, %v848
        %v850 = vlaneseq
        %v851 = vshrl.u32 %v850, 7
        %v852 = vsub.s32 2, %v851
        %v853 = vrot.slane %v736, %v852
        %v857 = vlaneseq
        %v858 = vshrl.u32 %v857, 7
        %v859 = vsub.s32 2, %v858
        %v860 = vrot.slane %v845, %v859
        %v861 = vlaneseq
        %v862 = vshrl.u32 %v861, 7
        %v863 = vsub.s32 2, %v862
        %v864 = vrot.slane %v849, %v863
        %v865 = vlaneseq
        %v866 = vshrl.u32 %v865, 7
        %v867 = vsub.s32 2, %v866
        %v868 = vrot.slane %v853, %v867
        %v869 = vmul.f32 %v840, %v860
        %v870 = vmul.f32 %v840, %v864
        %v871 = vmul.f32 %v840, %v868
        %875 = vrot.lane.b32.xlu0 %v869, 111
        %v876 = vpop.permute.xlu0 %875
        %877 = vrot.lane.b32.xlu0 %v870, 111
        %v878 = vpop.permute.xlu0 %877
        %879 = vrot.lane.b32.xlu0 %v871, 111
        %v880 = vpop.permute.xlu0 %879
        %v881 = vsel %vm782, %v876, %v878
        %v882 = vsel %vm782, %v878, %v880
        %v885 = vadd.f32 %v836, %v881
        %v886 = vadd.f32 %v837, %v882
        %887 = vset.pattern.permute.xlu0 19
        %888 = vperm.xlu0 %887, %v222
        %v889 = vpop.permute.xlu0 %888
        %v891 = vlaneseq
        %v892 = vshrl.u32 %v891, 7
        %v893 = vsub.s32 3, %v892
        %v894 = vrot.slane %v735, %v893
        %v895 = vlaneseq
        %v896 = vshrl.u32 %v895, 7
        %v897 = vsub.s32 7, %v896
        %v898 = vrot.slane %v735, %v897
        %v899 = vlaneseq
        %v900 = vshrl.u32 %v899, 7
        %v901 = vsub.s32 3, %v900
        %v902 = vrot.slane %v736, %v901
        %v906 = vlaneseq
        %v907 = vshrl.u32 %v906, 7
        %v908 = vsub.s32 3, %v907
        %v909 = vrot.slane %v894, %v908
        %v910 = vlaneseq
        %v911 = vshrl.u32 %v910, 7
        %v912 = vsub.s32 3, %v911
        %v913 = vrot.slane %v898, %v912
        %v914 = vlaneseq
        %v915 = vshrl.u32 %v914, 7
        %v916 = vsub.s32 3, %v915
        %v917 = vrot.slane %v902, %v916
        %v918 = vmul.f32 %v889, %v909
        %v919 = vmul.f32 %v889, %v913
        %v920 = vmul.f32 %v889, %v917
        %924 = vrot.lane.b32.xlu0 %v918, 111
        %v925 = vpop.permute.xlu0 %924
        %926 = vrot.lane.b32.xlu0 %v919, 111
        %v927 = vpop.permute.xlu0 %926
        %928 = vrot.lane.b32.xlu0 %v920, 111
        %v929 = vpop.permute.xlu0 %928
        %v930 = vsel %vm782, %v925, %v927
        %v931 = vsel %vm782, %v927, %v929
        %v934 = vadd.f32 %v885, %v930
        %v935 = vadd.f32 %v886, %v931
        %v936 = vcombine.high %v735, %v735
        %937 = vrot.lane.b32.xlu0 %v735, 110
        %v938 = vpop.permute.xlu0 %937
        %939 = vrot.lane.b32.xlu0 %v936, 110
        %v940 = vpop.permute.xlu0 %939
        %941 = vrot.lane.b32.xlu0 %v736, 110
        %v942 = vpop.permute.xlu0 %941
        %vm943 = vcmask 900096
        %v944 = vsel %vm943, %v938, %v940
        %v945 = vsel %vm943, %v940, %v942
        %v948 = vsel %vm573, %v944, 0.0
        %v949 = vsel %vm574, %v945, 0.0
        %950 = vset.pattern.permute.xlu0 20
        %951 = vperm.xlu0 %950, %v222
        %v952 = vpop.permute.xlu0 %951
        %v954 = vlaneseq
        %v955 = vshrl.u32 %v954, 7
        %v956 = vsub.s32 0, %v955
        %v957 = vrot.slane %v948, %v956
        %v958 = vlaneseq
        %v959 = vshrl.u32 %v958, 7
        %v960 = vsub.s32 0, %v959
        %v961 = vrot.slane %v949, %v960
        %v962 = vmul.f32 %v952, %v957
        %v963 = vmul.f32 %v952, %v961
        %v964 = vadd.f32 %v934, %v962
        %v965 = vadd.f32 %v935, %v963
        %966 = vset.pattern.permute.xlu0 21
        %967 = vperm.xlu0 %966, %v222
        %v968 = vpop.permute.xlu0 %967
        %v970 = vlaneseq
        %v971 = vshrl.u32 %v970, 7
        %v972 = vsub.s32 1, %v971
        %v973 = vrot.slane %v948, %v972
        %v974 = vlaneseq
        %v975 = vshrl.u32 %v974, 7
        %v976 = vsub.s32 1, %v975
        %v977 = vrot.slane %v949, %v976
        %v978 = vmul.f32 %v968, %v973
        %v979 = vmul.f32 %v968, %v977
        %v980 = vadd.f32 %v964, %v978
        %v981 = vadd.f32 %v965, %v979
        %982 = vset.pattern.permute.xlu0 22
        %983 = vperm.xlu0 %982, %v222
        %v984 = vpop.permute.xlu0 %983
        %v986 = vlaneseq
        %v987 = vshrl.u32 %v986, 7
        %v988 = vsub.s32 2, %v987
        %v989 = vrot.slane %v948, %v988
        %v990 = vlaneseq
        %v991 = vshrl.u32 %v990, 7
        %v992 = vsub.s32 2, %v991
        %v993 = vrot.slane %v949, %v992
        %v994 = vmul.f32 %v984, %v989
        %v995 = vmul.f32 %v984, %v993
        %v996 = vadd.f32 %v980, %v994
        %v997 = vadd.f32 %v981, %v995
        %998 = vset.pattern.permute.xlu0 23
        %999 = vperm.xlu0 %998, %v222
        %v1000 = vpop.permute.xlu0 %999
        %v1002 = vlaneseq
        %v1003 = vshrl.u32 %v1002, 7
        %v1004 = vsub.s32 3, %v1003
        %v1005 = vrot.slane %v948, %v1004
        %v1006 = vlaneseq
        %v1007 = vshrl.u32 %v1006, 7
        %v1008 = vsub.s32 3, %v1007
        %v1009 = vrot.slane %v949, %v1008
        %v1010 = vmul.f32 %v1000, %v1005
        %v1011 = vmul.f32 %v1000, %v1009
        %v1012 = vadd.f32 %v996, %v1010
        %v1013 = vadd.f32 %v997, %v1011
        %v1014 = vld [vmem:[#allocation2] sm:$0xff]
        %v1015 = vld [vmem:[#allocation2 + $0x8] sm:$0xf]
        %v1018 = vcombine.high %v1014, %v1014
        %1019 = vrot.lane.b32.xlu0 %v1014, 96
        %v1020 = vpop.permute.xlu0 %1019
        %1021 = vrot.lane.b32.xlu0 %v1018, 96
        %v1022 = vpop.permute.xlu0 %1021
        %1023 = vrot.lane.b32.xlu0 %v1015, 96
        %v1024 = vpop.permute.xlu0 %1023
        %vm1025 = vcmask 785408
        %v1026 = vsel %vm1025, %v1020, %v1022
        %v1027 = vsel %vm1025, %v1022, %v1024
        %v1030 = vsel %vm298, %v1026, 0.0
        %v1031 = vsel %vm299, %v1027, 0.0
        %1032 = vset.pattern.permute.xlu0 24
        %1033 = vperm.xlu0 %1032, %v222
        %v1034 = vpop.permute.xlu0 %1033
        %v1036 = vlaneseq
        %v1037 = vshrl.u32 %v1036, 7
        %v1038 = vsub.s32 0, %v1037
        %v1039 = vrot.slane %v1030, %v1038
        %v1040 = vlaneseq
        %v1041 = vshrl.u32 %v1040, 7
        %v1042 = vsub.s32 0, %v1041
        %v1043 = vrot.slane %v1031, %v1042
        %v1044 = vmul.f32 %v1034, %v1039
        %v1045 = vmul.f32 %v1034, %v1043
        %v1046 = vadd.f32 %v1012, %v1044
        %v1047 = vadd.f32 %v1013, %v1045
        %1048 = vset.pattern.permute.xlu0 25
        %1049 = vperm.xlu0 %1048, %v222
        %v1050 = vpop.permute.xlu0 %1049
        %v1052 = vlaneseq
        %v1053 = vshrl.u32 %v1052, 7
        %v1054 = vsub.s32 1, %v1053
        %v1055 = vrot.slane %v1030, %v1054
        %v1056 = vlaneseq
        %v1057 = vshrl.u32 %v1056, 7
        %v1058 = vsub.s32 1, %v1057
        %v1059 = vrot.slane %v1031, %v1058
        %v1060 = vmul.f32 %v1050, %v1055
        %v1061 = vmul.f32 %v1050, %v1059
        %v1062 = vadd.f32 %v1046, %v1060
        %v1063 = vadd.f32 %v1047, %v1061
        %1064 = vset.pattern.permute.xlu0 26
        %1065 = vperm.xlu0 %1064, %v222
        %v1066 = vpop.permute.xlu0 %1065
        %v1068 = vlaneseq
        %v1069 = vshrl.u32 %v1068, 7
        %v1070 = vsub.s32 2, %v1069
        %v1071 = vrot.slane %v1030, %v1070
        %v1072 = vlaneseq
        %v1073 = vshrl.u32 %v1072, 7
        %v1074 = vsub.s32 2, %v1073
        %v1075 = vrot.slane %v1031, %v1074
        %v1076 = vmul.f32 %v1066, %v1071
        %v1077 = vmul.f32 %v1066, %v1075
        %v1078 = vadd.f32 %v1062, %v1076
        %v1079 = vadd.f32 %v1063, %v1077
        %1080 = vset.pattern.permute.xlu0 27
        %1081 = vperm.xlu0 %1080, %v222
        %v1082 = vpop.permute.xlu0 %1081
        %v1084 = vlaneseq
        %v1085 = vshrl.u32 %v1084, 7
        %v1086 = vsub.s32 3, %v1085
        %v1087 = vrot.slane %v1030, %v1086
        %v1088 = vlaneseq
        %v1089 = vshrl.u32 %v1088, 7
        %v1090 = vsub.s32 3, %v1089
        %v1091 = vrot.slane %v1031, %v1090
        %v1092 = vmul.f32 %v1082, %v1087
        %v1093 = vmul.f32 %v1082, %v1091
        %v1094 = vadd.f32 %v1078, %v1092
        %v1095 = vadd.f32 %v1079, %v1093
        %v1096 = vld [vmem:[#allocation2] sm:$0xff]
        %v1097 = vld [vmem:[#allocation2 + $0x8] sm:$0xf]
        %1098 = vset.pattern.permute.xlu0 28
        %1099 = vperm.xlu0 %1098, %v222
        %v1100 = vpop.permute.xlu0 %1099
        %v1104 = vlaneseq
        %v1105 = vshrl.u32 %v1104, 7
        %v1106 = vsub.s32 0, %v1105
        %v1107 = vrot.slane %v1096, %v1106
        %v1108 = vlaneseq
        %v1109 = vshrl.u32 %v1108, 7
        %v1110 = vsub.s32 4, %v1109
        %v1111 = vrot.slane %v1096, %v1110
        %v1112 = vlaneseq
        %v1113 = vshrl.u32 %v1112, 7
        %v1114 = vsub.s32 0, %v1113
        %v1115 = vrot.slane %v1097, %v1114
        %v1119 = vlaneseq
        %v1120 = vshrl.u32 %v1119, 7
        %v1121 = vsub.s32 0, %v1120
        %v1122 = vrot.slane %v1107, %v1121
        %v1123 = vlaneseq
        %v1124 = vshrl.u32 %v1123, 7
        %v1125 = vsub.s32 0, %v1124
        %v1126 = vrot.slane %v1111, %v1125
        %v1127 = vlaneseq
        %v1128 = vshrl.u32 %v1127, 7
        %v1129 = vsub.s32 0, %v1128
        %v1130 = vrot.slane %v1115, %v1129
        %v1131 = vmul.f32 %v1100, %v1122
        %v1132 = vmul.f32 %v1100, %v1126
        %v1133 = vmul.f32 %v1100, %v1130
        %1137 = vrot.lane.b32.xlu0 %v1131, 95
        %v1138 = vpop.permute.xlu0 %1137
        %1139 = vrot.lane.b32.xlu0 %v1132, 95
        %v1140 = vpop.permute.xlu0 %1139
        %1141 = vrot.lane.b32.xlu0 %v1133, 95
        %v1142 = vpop.permute.xlu0 %1141
        %vm1143 = vcmask 777216
        %v1144 = vsel %vm1143, %v1138, %v1140
        %v1145 = vsel %vm1143, %v1140, %v1142
        %v1148 = vadd.f32 %v1094, %v1144
        %v1149 = vadd.f32 %v1095, %v1145
        %1150 = vset.pattern.permute.xlu0 29
        %1151 = vperm.xlu0 %1150, %v222
        %v1152 = vpop.permute.xlu0 %1151
        %v1154 = vlaneseq
        %v1155 = vshrl.u32 %v1154, 7
        %v1156 = vsub.s32 1, %v1155
        %v1157 = vrot.slane %v1096, %v1156
        %v1158 = vlaneseq
        %v1159 = vshrl.u32 %v1158, 7
        %v1160 = vsub.s32 5, %v1159
        %v1161 = vrot.slane %v1096, %v1160
        %v1162 = vlaneseq
        %v1163 = vshrl.u32 %v1162, 7
        %v1164 = vsub.s32 1, %v1163
        %v1165 = vrot.slane %v1097, %v1164
        %v1169 = vlaneseq
        %v1170 = vshrl.u32 %v1169, 7
        %v1171 = vsub.s32 1, %v1170
        %v1172 = vrot.slane %v1157, %v1171
        %v1173 = vlaneseq
        %v1174 = vshrl.u32 %v1173, 7
        %v1175 = vsub.s32 1, %v1174
        %v1176 = vrot.slane %v1161, %v1175
        %v1177 = vlaneseq
        %v1178 = vshrl.u32 %v1177, 7
        %v1179 = vsub.s32 1, %v1178
        %v1180 = vrot.slane %v1165, %v1179
        %v1181 = vmul.f32 %v1152, %v1172
        %v1182 = vmul.f32 %v1152, %v1176
        %v1183 = vmul.f32 %v1152, %v1180
        %1187 = vrot.lane.b32.xlu0 %v1181, 95
        %v1188 = vpop.permute.xlu0 %1187
        %1189 = vrot.lane.b32.xlu0 %v1182, 95
        %v1190 = vpop.permute.xlu0 %1189
        %1191 = vrot.lane.b32.xlu0 %v1183, 95
        %v1192 = vpop.permute.xlu0 %1191
        %v1193 = vsel %vm1143, %v1188, %v1190
        %v1194 = vsel %vm1143, %v1190, %v1192
        %v1197 = vadd.f32 %v1148, %v1193
        %v1198 = vadd.f32 %v1149, %v1194
        %1199 = vset.pattern.permute.xlu0 30
        %1200 = vperm.xlu0 %1199, %v222
        %v1201 = vpop.permute.xlu0 %1200
        %v1203 = vlaneseq
        %v1204 = vshrl.u32 %v1203, 7
        %v1205 = vsub.s32 2, %v1204
        %v1206 = vrot.slane %v1096, %v1205
        %v1207 = vlaneseq
        %v1208 = vshrl.u32 %v1207, 7
        %v1209 = vsub.s32 6, %v1208
        %v1210 = vrot.slane %v1096, %v1209
        %v1211 = vlaneseq
        %v1212 = vshrl.u32 %v1211, 7
        %v1213 = vsub.s32 2, %v1212
        %v1214 = vrot.slane %v1097, %v1213
        %v1218 = vlaneseq
        %v1219 = vshrl.u32 %v1218, 7
        %v1220 = vsub.s32 2, %v1219
        %v1221 = vrot.slane %v1206, %v1220
        %v1222 = vlaneseq
        %v1223 = vshrl.u32 %v1222, 7
        %v1224 = vsub.s32 2, %v1223
        %v1225 = vrot.slane %v1210, %v1224
        %v1226 = vlaneseq
        %v1227 = vshrl.u32 %v1226, 7
        %v1228 = vsub.s32 2, %v1227
        %v1229 = vrot.slane %v1214, %v1228
        %v1230 = vmul.f32 %v1201, %v1221
        %v1231 = vmul.f32 %v1201, %v1225
        %v1232 = vmul.f32 %v1201, %v1229
        %1236 = vrot.lane.b32.xlu0 %v1230, 95
        %v1237 = vpop.permute.xlu0 %1236
        %1238 = vrot.lane.b32.xlu0 %v1231, 95
        %v1239 = vpop.permute.xlu0 %1238
        %1240 = vrot.lane.b32.xlu0 %v1232, 95
        %v1241 = vpop.permute.xlu0 %1240
        %v1242 = vsel %vm1143, %v1237, %v1239
        %v1243 = vsel %vm1143, %v1239, %v1241
        %v1246 = vadd.f32 %v1197, %v1242
        %v1247 = vadd.f32 %v1198, %v1243
        %1248 = vset.pattern.permute.xlu0 31
        %1249 = vperm.xlu0 %1248, %v222
        %v1250 = vpop.permute.xlu0 %1249
        %v1252 = vlaneseq
        %v1253 = vshrl.u32 %v1252, 7
        %v1254 = vsub.s32 3, %v1253
        %v1255 = vrot.slane %v1096, %v1254
        %v1256 = vlaneseq
        %v1257 = vshrl.u32 %v1256, 7
        %v1258 = vsub.s32 7, %v1257
        %v1259 = vrot.slane %v1096, %v1258
        %v1260 = vlaneseq
        %v1261 = vshrl.u32 %v1260, 7
        %v1262 = vsub.s32 3, %v1261
        %v1263 = vrot.slane %v1097, %v1262
        %v1267 = vlaneseq
        %v1268 = vshrl.u32 %v1267, 7
        %v1269 = vsub.s32 3, %v1268
        %v1270 = vrot.slane %v1255, %v1269
        %v1271 = vlaneseq
        %v1272 = vshrl.u32 %v1271, 7
        %v1273 = vsub.s32 3, %v1272
        %v1274 = vrot.slane %v1259, %v1273
        %v1275 = vlaneseq
        %v1276 = vshrl.u32 %v1275, 7
        %v1277 = vsub.s32 3, %v1276
        %v1278 = vrot.slane %v1263, %v1277
        %v1279 = vmul.f32 %v1250, %v1270
        %v1280 = vmul.f32 %v1250, %v1274
        %v1281 = vmul.f32 %v1250, %v1278
        %1285 = vrot.lane.b32.xlu0 %v1279, 95
        %v1286 = vpop.permute.xlu0 %1285
        %1287 = vrot.lane.b32.xlu0 %v1280, 95
        %v1288 = vpop.permute.xlu0 %1287
        %1289 = vrot.lane.b32.xlu0 %v1281, 95
        %v1290 = vpop.permute.xlu0 %1289
        %v1291 = vsel %vm1143, %v1286, %v1288
        %v1292 = vsel %vm1143, %v1288, %v1290
        %v1295 = vadd.f32 %v1246, %v1291
        %v1296 = vadd.f32 %v1247, %v1292
        %v1297 = vcombine.high %v1096, %v1096
        %1298 = vrot.lane.b32.xlu0 %v1096, 94
        %v1299 = vpop.permute.xlu0 %1298
        %1300 = vrot.lane.b32.xlu0 %v1297, 94
        %v1301 = vpop.permute.xlu0 %1300
        %1302 = vrot.lane.b32.xlu0 %v1097, 94
        %v1303 = vpop.permute.xlu0 %1302
        %vm1304 = vcmask 769024
        %v1305 = vsel %vm1304, %v1299, %v1301
        %v1306 = vsel %vm1304, %v1301, %v1303
        %v1309 = vsel %vm573, %v1305, 0.0
        %v1310 = vsel %vm574, %v1306, 0.0
        %1311 = vset.pattern.permute.xlu0 32
        %1312 = vperm.xlu0 %1311, %v222
        %v1313 = vpop.permute.xlu0 %1312
        %v1315 = vlaneseq
        %v1316 = vshrl.u32 %v1315, 7
        %v1317 = vsub.s32 0, %v1316
        %v1318 = vrot.slane %v1309, %v1317
        %v1319 = vlaneseq
        %v1320 = vshrl.u32 %v1319, 7
        %v1321 = vsub.s32 0, %v1320
        %v1322 = vrot.slane %v1310, %v1321
        %v1323 = vmul.f32 %v1313, %v1318
        %v1324 = vmul.f32 %v1313, %v1322
        %v1325 = vadd.f32 %v1295, %v1323
        %v1326 = vadd.f32 %v1296, %v1324
        %1327 = vset.pattern.permute.xlu0 33
        %1328 = vperm.xlu0 %1327, %v222
        %v1329 = vpop.permute.xlu0 %1328
        %v1331 = vlaneseq
        %v1332 = vshrl.u32 %v1331, 7
        %v1333 = vsub.s32 1, %v1332
        %v1334 = vrot.slane %v1309, %v1333
        %v1335 = vlaneseq
        %v1336 = vshrl.u32 %v1335, 7
        %v1337 = vsub.s32 1, %v1336
        %v1338 = vrot.slane %v1310, %v1337
        %v1339 = vmul.f32 %v1329, %v1334
        %v1340 = vmul.f32 %v1329, %v1338
        %v1341 = vadd.f32 %v1325, %v1339
        %v1342 = vadd.f32 %v1326, %v1340
        %1343 = vset.pattern.permute.xlu0 34
        %1344 = vperm.xlu0 %1343, %v222
        %v1345 = vpop.permute.xlu0 %1344
        %v1347 = vlaneseq
        %v1348 = vshrl.u32 %v1347, 7
        %v1349 = vsub.s32 2, %v1348
        %v1350 = vrot.slane %v1309, %v1349
        %v1351 = vlaneseq
        %v1352 = vshrl.u32 %v1351, 7
        %v1353 = vsub.s32 2, %v1352
        %v1354 = vrot.slane %v1310, %v1353
        %v1355 = vmul.f32 %v1345, %v1350
        %v1356 = vmul.f32 %v1345, %v1354
        %v1357 = vadd.f32 %v1341, %v1355
        %v1358 = vadd.f32 %v1342, %v1356
        %1359 = vset.pattern.permute.xlu0 35
        %1360 = vperm.xlu0 %1359, %v222
        %v1361 = vpop.permute.xlu0 %1360
        %v1363 = vlaneseq
        %v1364 = vshrl.u32 %v1363, 7
        %v1365 = vsub.s32 3, %v1364
        %v1366 = vrot.slane %v1309, %v1365
        %v1367 = vlaneseq
        %v1368 = vshrl.u32 %v1367, 7
        %v1369 = vsub.s32 3, %v1368
        %v1370 = vrot.slane %v1310, %v1369
        %v1371 = vmul.f32 %v1361, %v1366
        %v1372 = vmul.f32 %v1361, %v1370
        %v1373 = vadd.f32 %v1357, %v1371
        %v1374 = vadd.f32 %v1358, %v1372
        %v1376 = vcombine.high %v254, %v254
        %1378 = vst [vmem:[%s215] sm:$0xf] %v254
        %1379 = vst [vmem:[%s215 + $0x8] sm:$0xf] %v1376
        %v1382 = vrot.slane %v1373, 4
        %v1383 = vrot.slane %v1374, 4
        %1386 = vst [vmem:[%s215] sm:$0xf0] %v1382
        %1387 = vst [vmem:[%s215 + $0x8] sm:$0xf0] %v1383
        %1388 = vst [vmem:[%s215 + $0x10] sm:$0xf] %v1382
        %1389 = vst [vmem:[%s215 + $0x18] sm:$0xf] %v1383
        %p1390 = scmp.lt.s32.totalorder %s18, 1
        %s1391 = scalar_select %p1390, %s18, 1
        %s1392 = smul.addr %s1391, 4
        %s1393 = smul.addr %s1392, 8
        %s1394 = scalar_lea.vmem %s4, %s1393
        // Predicated region
        $region41: #{tpu_custom_call.1} parent=35 // pred_check
          %p1395 = pneg %p125
        $region42: #{tpu_custom_call.1} parent=35 // pred_check_branch
          %1397 = sbr.rel (%p1395) target = $region44
        $region43: #{tpu_custom_call.1} parent=35 // pred_region
          _
        $region44: #{tpu_custom_call.1} parent=35 // pred_fallthru
          _
      $region36: #{tpu_custom_call.1} parent=5 // pred_fallthru
        _
      %p1398 = scmp.le.s32.totalorder 2, %s13
      // Predicated region
      $region45: #{tpu_custom_call.1} parent=5 // pred_check
        %p1399 = pneg %p1398
      $region46: #{tpu_custom_call.1} parent=5 // pred_check_branch
        %1401 = sbr.rel (%p1399) target = $region48
      $region47: #{tpu_custom_call.1} parent=5 // pred_region
        %s1402 = ssub.s32 %s13, 2
        // Predicated region
        $region49: #{tpu_custom_call.1} parent=47 // pred_check
          %p1403 = pneg %p131
        $region50: #{tpu_custom_call.1} parent=47 // pred_check_branch
          %1405 = sbr.rel (%p1403) target = $region52
        $region51: #{tpu_custom_call.1} parent=47 // pred_region
          %p1406 = scmp.lt.s32.totalorder %s19, 1
          %s1407 = scalar_select %p1406, %s19, 1
          %s1408 = smul.addr %s1407, 4
          %s1409 = smul.addr %s1408, 8
          %s1410 = scalar_lea.vmem %s4, %s1409
        $region52: #{tpu_custom_call.1} parent=47 // pred_fallthru
          _
      $region48: #{tpu_custom_call.1} parent=5 // pred_fallthru
        _
    $region6: #{tpu_custom_call.1} parent=1 // loop_footer
      %s17 = sadd.s32 1, %s13
    $region7: #{tpu_custom_call.1} parent=1 // loop_footer_branch
      %12 = sbr.rel target = $region3
    $region8: #{tpu_custom_call.1} parent=1 // loop_exit
      _
    %1411 = vsyncpa [#allocation4], 1
    %s1412 = scalar_lea.sflag [#allocation4], 1
    %1413 = vsyncpa %s1412, 1

</llo_original>
